<compile_context>
chip_gen: v6e
topology: v6e:2x2x1
jax: 0.10.0
libtpu: 0.0.40
codegen_flags: <defaults>
</compile_context>

<pallas_src>
import functools

import jax
import jax.numpy as jnp
from jax.experimental import pallas as pl
from jax.experimental.pallas import tpu as pltpu


HIDDEN = 300          # nn.Linear(.., 300) in the PyTorch module
HIDDEN_PAD = 384      # 3 * 128 lanes -> dense vregs / unmasked loads+stores
OUT_PAD = 128         # lane-dense output: q1 in lane 0, q2 in lane 1


def _round_up(n, m):
    return ((n + m - 1) // m) * m


def _critic_kernel(xu_ref,
                   w14_ref, b14_ref,
                   w2_ref, b2_ref, w5_ref, b5_ref,
                   w36_ref, b36_ref,
                   q_ref):
    """Twin-Q critic forward for one batch tile.

    Layer 1 (both heads fused on the lane axis, single K=in_dim dot):
        h = relu(xu @ [W1|W4] + [b1|b4])                      -> (TB, 2*HP)
    Layer 2 (per head):
        h1 = relu(h[:, :HP] @ W2 + b2), h2 = relu(h[:, HP:] @ W5 + b5)
    Layer 3 (block-diagonal, lane-dense projection, one (TB, 128) store):
        q[:, 0] = h1 @ w3, q[:, 1] = h2 @ w6  (+ biases), lanes 2..127 = 0
    """
    HP = w2_ref.shape[0]
    cdt = w2_ref.dtype  # compute dtype for MXU inputs (bf16)

    # --- layer 1: fused over both heads, one MXU pass ---
    h = jnp.dot(xu_ref[...].astype(cdt), w14_ref[...],
                preferred_element_type=jnp.float32)
    h = jnp.maximum(h + b14_ref[...], 0.0)

    # lane-aligned split (HP is a multiple of 128)
    h1 = h[:, :HP].astype(cdt)
    h2 = h[:, HP:].astype(cdt)

    # --- layer 2 ---
    h1 = jnp.maximum(
        jnp.dot(h1, w2_ref[...], preferred_element_type=jnp.float32) + b2_ref[...],
        0.0).astype(cdt)
    h2 = jnp.maximum(
        jnp.dot(h2, w5_ref[...], preferred_element_type=jnp.float32) + b5_ref[...],
        0.0).astype(cdt)

    # --- layer 3: block-diagonal, lane-dense (TB, 128) write ---
    q = (jnp.dot(h1, w36_ref[pl.ds(0, HP), :], preferred_element_type=jnp.float32)
         + jnp.dot(h2, w36_ref[pl.ds(HP, HP), :], preferred_element_type=jnp.float32)
         + b36_ref[...])
    q_ref[...] = q.astype(q_ref.dtype)


def prepare_params(params, hidden=HIDDEN, hidden_pad=HIDDEN_PAD,
                   out_pad=OUT_PAD, weight_dtype=jnp.bfloat16):
    """Fuse / pad / cast raw per-layer params into the kernel layout (one-time)."""
    assert hidden_pad % 128 == 0 and hidden_pad >= hidden
    (w1, b1, w2, b2, w3, b3, w4, b4, w5, b5, w6, b6) = params
    H, HP = hidden, hidden_pad

    pad_cols = lambda w: jnp.pad(w, ((0, 0), (0, HP - H)))          # (in, H) -> (in, HP)
    pad_bias = lambda b: jnp.pad(b, ((0, 0), (0, HP - H)))          # (1, H)  -> (1, HP)
    pad_sq   = lambda w: jnp.pad(w, ((0, HP - H), (0, HP - H)))     # (H, H)  -> (HP, HP)

    # Fused first layer: columns = [head1 | head2]
    w14 = jnp.concatenate([pad_cols(w1), pad_cols(w4)], axis=1)      # (in_dim, 2*HP)
    b14 = jnp.concatenate([pad_bias(b1), pad_bias(b4)], axis=1)      # (1, 2*HP)

    w2p, w5p = pad_sq(w2), pad_sq(w5)
    b2p, b5p = pad_bias(b2), pad_bias(b5)

    # Lane-dense block-diagonal output projection: q[:,0] <- head1@w3, q[:,1] <- head2@w6
    w36 = jnp.zeros((2 * HP, out_pad), jnp.float32)
    w36 = w36.at[:H, 0:1].set(w3)
    w36 = w36.at[HP:HP + H, 1:2].set(w6)
    b36 = jnp.pad(jnp.concatenate([b3, b6], axis=1),
                  ((0, 0), (0, out_pad - 2)))                        # (1, 128)

    wd = weight_dtype
    return (w14.astype(wd), b14.astype(jnp.float32),
            w2p.astype(wd), b2p.astype(jnp.float32),
            w5p.astype(wd), b5p.astype(jnp.float32),
            w36.astype(wd), b36.astype(jnp.float32))


def _resident_spec(shape):
    """Constant-index-map weight spec; single-buffer it when supported."""
    try:
        return pl.BlockSpec(shape, lambda i: (0, 0), pipeline_mode=pl.Buffered(1))
    except TypeError:  # older JAX without pipeline_mode kwarg
        return pl.BlockSpec(shape, lambda i: (0, 0))


@functools.partial(jax.jit, static_argnames=("block_batch",))
def manager_critic_forward(x, g, u, prepared, *, block_batch=1024):
    """Forward pass of ManagerCritic: returns (q1, q2), each [batch, 1].

    block_batch: target batch tile per grid step (weights stay resident across
    steps).  The same large tile is used on v5e/v6e/v7x; TB is the streamed M
    dimension and is not tied to MXU width.
    """
    B = x.shape[0]
    in_dim = x.shape[1] + g.shape[1] + u.shape[1]
    HP2 = prepared[0].shape[1]           # 2 * HIDDEN_PAD
    HP = HP2 // 2

    # one cheap, XLA-fusible concat -> single K=in_dim dot in the kernel
    xu = jnp.concatenate([x, g, u], axis=1)

    # --- batch tiling: even tiles (waste < 8 rows/tile); keep >= 2 grid steps
    # for larger batches so ("parallel",) can shard across v7x's 2 TensorCores.
    bb = max(8, _round_up(block_batch, 8))   # defensive sublane rounding
    nt = -(-B // bb)
    if nt < 2 and B > 256:
        nt = 2
    TB = _round_up(-(-B // nt), 8)
    B_pad = nt * TB
    if B_pad != B:
        xu = jnp.pad(xu, ((0, B_pad - B), (0, 0)))

    in_specs = ([pl.BlockSpec((TB, in_dim), lambda i: (i, 0))]
                + [_resident_spec(p.shape) for p in prepared])

    weight_bytes = sum(int(p.size) * p.dtype.itemsize for p in prepared)
    cost = pl.CostEstimate(
        flops=2 * B_pad * (in_dim * HP2 + 2 * HP * HP + HP2 * OUT_PAD),
        transcendentals=0,
        bytes_accessed=weight_bytes + B_pad * (in_dim + OUT_PAD) * 4)

    cp_kwargs = dict(dimension_semantics=("parallel",))
    if TB > 2048:
        # footprint is a few MB at default tiles; only raise the scoped VMEM
        # limit when the tile is pushed well past the overhead-amortized point.
        cp_kwargs["vmem_limit_bytes"] = 64 * 1024 * 1024

    q = pl.pallas_call(
        _critic_kernel,
        out_shape=jax.ShapeDtypeStruct((B_pad, OUT_PAD), jnp.float32),
        grid=(nt,),
        in_specs=in_specs,
        out_specs=pl.BlockSpec((TB, OUT_PAD), lambda i: (i, 0)),
        compiler_params=pltpu.CompilerParams(**cp_kwargs),
        cost_estimate=cost,
    )(xu, *prepared)

    return q[:B, 0:1], q[:B, 1:2]


def init_params(key, state_dim, goal_dim, action_dim, hidden=HIDDEN):
    """Deterministic synthetic init matching nn.Linear shapes (stored as (in, out))."""
    in_dim = state_dim + goal_dim + action_dim
    dims = [
        (in_dim, hidden),   # l1
        (hidden, hidden),   # l2
        (hidden, 1),        # l3
        (in_dim, hidden),   # l4
        (hidden, hidden),   # l5
        (hidden, 1),        # l6
    ]
    params = []
    for i, (din, dout) in enumerate(dims):
        kw, kb = jax.random.split(jax.random.fold_in(key, i))
        bound = 1.0 / jnp.sqrt(din)
        w = jax.random.uniform(kw, (din, dout), jnp.float32, -bound, bound)
        b = jax.random.uniform(kb, (1, dout), jnp.float32, -bound, bound)
        params += [w, b]
    return tuple(params)


def reference_forward(x, g, u, params, weight_dtype=jnp.bfloat16):
    """Pure-JAX reference mirroring the kernel's bf16-weight / f32-accumulate math."""
    (w1, b1, w2, b2, w3, b3, w4, b4, w5, b5, w6, b6) = params
    qz = lambda a: a.astype(weight_dtype).astype(jnp.float32)
    xu = jnp.concatenate([x, g, u], axis=1)
    h1 = jax.nn.relu(qz(xu) @ qz(w1) + b1)
    h1 = jax.nn.relu(qz(h1) @ qz(w2) + b2)
    q1 = qz(h1) @ qz(w3) + b3
    h2 = jax.nn.relu(qz(xu) @ qz(w4) + b4)
    h2 = jax.nn.relu(qz(h2) @ qz(w5) + b5)
    q2 = qz(h2) @ qz(w6) + b6
    return q1, q2


if __name__ == "__main__":
    key = jax.random.PRNGKey(0)
    state_dim, goal_dim, action_dim = 16, 8, 8
    batch = 8

    kx, kg, ku, kp = jax.random.split(key, 4)
    x = jax.random.normal(kx, (batch, state_dim), jnp.float32)
    g = jax.random.normal(kg, (batch, goal_dim), jnp.float32)
    u = jax.random.normal(ku, (batch, action_dim), jnp.float32)

    params = init_params(kp, state_dim, goal_dim, action_dim)
    prepared = prepare_params(params)

    q1, q2 = manager_critic_forward(x, g, u, prepared)
    q1 = jax.block_until_ready(q1)
    q2 = jax.block_until_ready(q2)

    r1, r2 = reference_forward(x, g, u, params)
    assert q1.shape == (batch, 1) and q2.shape == (batch, 1)
    assert jnp.allclose(q1, r1, atol=1e-2, rtol=1e-2), (q1, r1)
    assert jnp.allclose(q2, r2, atol=1e-2, rtol=1e-2), (q2, r2)

    print("KERNEL_OK")
</pallas_src>

<mosaic_0001>
module attributes {stable_mosaic.version = 11 : i64} {
  func.func @_critic_kernel(%arg0: i32, %arg1: memref<8x32xf32, #tpu.memory_space<vmem>>, %arg2: memref<32x768xbf16, #tpu.memory_space<vmem>>, %arg3: memref<1x768xf32, #tpu.memory_space<vmem>>, %arg4: memref<384x384xbf16, #tpu.memory_space<vmem>>, %arg5: memref<1x384xf32, #tpu.memory_space<vmem>>, %arg6: memref<384x384xbf16, #tpu.memory_space<vmem>>, %arg7: memref<1x384xf32, #tpu.memory_space<vmem>>, %arg8: memref<768x128xbf16, #tpu.memory_space<vmem>>, %arg9: memref<1x128xf32, #tpu.memory_space<vmem>>, %arg10: memref<8x128xf32, #tpu.memory_space<vmem>>) attributes {dimension_semantics = [#tpu.dimension_semantics<parallel>], iteration_bounds = array<i64: 1>, scalar_prefetch = 0 : i64, scratch_operands = 0 : i64, tpu.core_type = #tpu.core_type<tc>, window_params = [{transform_indices = @transform_0, window_bounds = array<i64: 8, 32>}, {pipeline_mode = #tpu.pipeline_mode<synchronous>, transform_indices = @transform_1, window_bounds = array<i64: 32, 768>}, {pipeline_mode = #tpu.pipeline_mode<synchronous>, transform_indices = @transform_2, window_bounds = array<i64: 1, 768>}, {pipeline_mode = #tpu.pipeline_mode<synchronous>, transform_indices = @transform_3, window_bounds = array<i64: 384, 384>}, {pipeline_mode = #tpu.pipeline_mode<synchronous>, transform_indices = @transform_4, window_bounds = array<i64: 1, 384>}, {pipeline_mode = #tpu.pipeline_mode<synchronous>, transform_indices = @transform_5, window_bounds = array<i64: 384, 384>}, {pipeline_mode = #tpu.pipeline_mode<synchronous>, transform_indices = @transform_6, window_bounds = array<i64: 1, 384>}, {pipeline_mode = #tpu.pipeline_mode<synchronous>, transform_indices = @transform_7, window_bounds = array<i64: 768, 128>}, {pipeline_mode = #tpu.pipeline_mode<synchronous>, transform_indices = @transform_8, window_bounds = array<i64: 1, 128>}, {transform_indices = @transform_9, window_bounds = array<i64: 8, 128>}]} {
    %c0 = arith.constant 0 : index
    %c0_0 = arith.constant 0 : index
    %0 = vector.load %arg1[%c0, %c0_0] : memref<8x32xf32, #tpu.memory_space<vmem>>, vector<8x32xf32>
    %1 = arith.truncf %0 : vector<8x32xf32> to vector<8x32xbf16>
    %c0_1 = arith.constant 0 : index
    %c0_2 = arith.constant 0 : index
    %2 = vector.load %arg2[%c0_1, %c0_2] : memref<32x768xbf16, #tpu.memory_space<vmem>>, vector<32x768xbf16>
    %cst = arith.constant dense<0.000000e+00> : vector<8x768xf32>
    %3 = tpu.matmul %1, %2, %cst {dimension_numbers = #tpu.dot_dimension_numbers<[1], [0], [0], [1], [0, 0, 1, 1], [], []>} : vector<8x32xbf16>, vector<32x768xbf16>, vector<8x768xf32> -> vector<8x768xf32>
    %c0_3 = arith.constant 0 : index
    %c0_4 = arith.constant 0 : index
    %4 = vector.load %arg3[%c0_3, %c0_4] : memref<1x768xf32, #tpu.memory_space<vmem>>, vector<1x768xf32>
    %5 = vector.broadcast %4 : vector<1x768xf32> to vector<8x768xf32>
    %6 = arith.addf %3, %5 : vector<8x768xf32>
    %cst_5 = arith.constant 0.000000e+00 : f32
    %7 = vector.broadcast %cst_5 : f32 to vector<8x768xf32>
    %8 = arith.maximumf %6, %7 : vector<8x768xf32>
    %9 = vector.extract_strided_slice %8 {offsets = [0, 0], sizes = [8, 384], strides = [1, 1]} : vector<8x768xf32> to vector<8x384xf32>
    %10 = arith.truncf %9 : vector<8x384xf32> to vector<8x384xbf16>
    %11 = vector.extract_strided_slice %8 {offsets = [0, 384], sizes = [8, 384], strides = [1, 1]} : vector<8x768xf32> to vector<8x384xf32>
    %12 = arith.truncf %11 : vector<8x384xf32> to vector<8x384xbf16>
    %c0_6 = arith.constant 0 : index
    %c0_7 = arith.constant 0 : index
    %13 = vector.load %arg4[%c0_6, %c0_7] : memref<384x384xbf16, #tpu.memory_space<vmem>>, vector<384x384xbf16>
    %cst_8 = arith.constant dense<0.000000e+00> : vector<8x384xf32>
    %14 = tpu.matmul %10, %13, %cst_8 {dimension_numbers = #tpu.dot_dimension_numbers<[1], [0], [0], [1], [0, 0, 1, 1], [], []>} : vector<8x384xbf16>, vector<384x384xbf16>, vector<8x384xf32> -> vector<8x384xf32>
    %c0_9 = arith.constant 0 : index
    %c0_10 = arith.constant 0 : index
    %15 = vector.load %arg5[%c0_9, %c0_10] : memref<1x384xf32, #tpu.memory_space<vmem>>, vector<1x384xf32>
    %16 = vector.broadcast %15 : vector<1x384xf32> to vector<8x384xf32>
    %17 = arith.addf %14, %16 : vector<8x384xf32>
    %cst_11 = arith.constant 0.000000e+00 : f32
    %18 = vector.broadcast %cst_11 : f32 to vector<8x384xf32>
    %19 = arith.maximumf %17, %18 : vector<8x384xf32>
    %20 = arith.truncf %19 : vector<8x384xf32> to vector<8x384xbf16>
    %c0_12 = arith.constant 0 : index
    %c0_13 = arith.constant 0 : index
    %21 = vector.load %arg6[%c0_12, %c0_13] : memref<384x384xbf16, #tpu.memory_space<vmem>>, vector<384x384xbf16>
    %cst_14 = arith.constant dense<0.000000e+00> : vector<8x384xf32>
    %22 = tpu.matmul %12, %21, %cst_14 {dimension_numbers = #tpu.dot_dimension_numbers<[1], [0], [0], [1], [0, 0, 1, 1], [], []>} : vector<8x384xbf16>, vector<384x384xbf16>, vector<8x384xf32> -> vector<8x384xf32>
    %c0_15 = arith.constant 0 : index
    %c0_16 = arith.constant 0 : index
    %23 = vector.load %arg7[%c0_15, %c0_16] : memref<1x384xf32, #tpu.memory_space<vmem>>, vector<1x384xf32>
    %24 = vector.broadcast %23 : vector<1x384xf32> to vector<8x384xf32>
    %25 = arith.addf %22, %24 : vector<8x384xf32>
    %cst_17 = arith.constant 0.000000e+00 : f32
    %26 = vector.broadcast %cst_17 : f32 to vector<8x384xf32>
    %27 = arith.maximumf %25, %26 : vector<8x384xf32>
    %28 = arith.truncf %27 : vector<8x384xf32> to vector<8x384xbf16>
    %c0_18 = arith.constant 0 : index
    %c0_19 = arith.constant 0 : index
    %29 = vector.load %arg8[%c0_18, %c0_19] : memref<768x128xbf16, #tpu.memory_space<vmem>>, vector<384x128xbf16>
    %cst_20 = arith.constant dense<0.000000e+00> : vector<8x128xf32>
    %30 = tpu.matmul %20, %29, %cst_20 {dimension_numbers = #tpu.dot_dimension_numbers<[1], [0], [0], [1], [0, 0, 1, 1], [], []>} : vector<8x384xbf16>, vector<384x128xbf16>, vector<8x128xf32> -> vector<8x128xf32>
    %c384 = arith.constant 384 : index
    %c0_21 = arith.constant 0 : index
    %31 = vector.load %arg8[%c384, %c0_21] : memref<768x128xbf16, #tpu.memory_space<vmem>>, vector<384x128xbf16>
    %cst_22 = arith.constant dense<0.000000e+00> : vector<8x128xf32>
    %32 = tpu.matmul %28, %31, %cst_22 {dimension_numbers = #tpu.dot_dimension_numbers<[1], [0], [0], [1], [0, 0, 1, 1], [], []>} : vector<8x384xbf16>, vector<384x128xbf16>, vector<8x128xf32> -> vector<8x128xf32>
    %33 = arith.addf %30, %32 : vector<8x128xf32>
    %c0_23 = arith.constant 0 : index
    %c0_24 = arith.constant 0 : index
    %34 = vector.load %arg9[%c0_23, %c0_24] : memref<1x128xf32, #tpu.memory_space<vmem>>, vector<1x128xf32>
    %35 = vector.broadcast %34 : vector<1x128xf32> to vector<8x128xf32>
    %36 = arith.addf %33, %35 : vector<8x128xf32>
    %c0_25 = arith.constant 0 : index
    %c0_26 = arith.constant 0 : index
    %37 = vector.load %arg10[%c0_25, %c0_26] : memref<8x128xf32, #tpu.memory_space<vmem>>, vector<8x128xf32>
    tpu.vector_store %arg10[%c0_25, %c0_26], %36 {strides = array<i32>} : memref<8x128xf32, #tpu.memory_space<vmem>>, vector<8x128xf32>,
    return
  }
  func.func @transform_0(%arg0: i32) -> (i32, i32) {
    %c0_i32 = arith.constant 0 : i32
    %c0_i32_0 = arith.constant 0 : i32
    return %arg0, %c0_i32 : i32, i32
  }
  func.func @transform_1(%arg0: i32) -> (i32, i32) {
    %c0_i32 = arith.constant 0 : i32
    %c0_i32_0 = arith.constant 0 : i32
    %c0_i32_1 = arith.constant 0 : i32
    return %c0_i32, %c0_i32_0 : i32, i32
  }
  func.func @transform_2(%arg0: i32) -> (i32, i32) {
    %c0_i32 = arith.constant 0 : i32
    %c0_i32_0 = arith.constant 0 : i32
    %c0_i32_1 = arith.constant 0 : i32
    return %c0_i32, %c0_i32_0 : i32, i32
  }
  func.func @transform_3(%arg0: i32) -> (i32, i32) {
    %c0_i32 = arith.constant 0 : i32
    %c0_i32_0 = arith.constant 0 : i32
    %c0_i32_1 = arith.constant 0 : i32
    return %c0_i32, %c0_i32_0 : i32, i32
  }
  func.func @transform_4(%arg0: i32) -> (i32, i32) {
    %c0_i32 = arith.constant 0 : i32
    %c0_i32_0 = arith.constant 0 : i32
    %c0_i32_1 = arith.constant 0 : i32
    return %c0_i32, %c0_i32_0 : i32, i32
  }
  func.func @transform_5(%arg0: i32) -> (i32, i32) {
    %c0_i32 = arith.constant 0 : i32
    %c0_i32_0 = arith.constant 0 : i32
    %c0_i32_1 = arith.constant 0 : i32
    return %c0_i32, %c0_i32_0 : i32, i32
  }
  func.func @transform_6(%arg0: i32) -> (i32, i32) {
    %c0_i32 = arith.constant 0 : i32
    %c0_i32_0 = arith.constant 0 : i32
    %c0_i32_1 = arith.constant 0 : i32
    return %c0_i32, %c0_i32_0 : i32, i32
  }
  func.func @transform_7(%arg0: i32) -> (i32, i32) {
    %c0_i32 = arith.constant 0 : i32
    %c0_i32_0 = arith.constant 0 : i32
    %c0_i32_1 = arith.constant 0 : i32
    return %c0_i32, %c0_i32_0 : i32, i32
  }
  func.func @transform_8(%arg0: i32) -> (i32, i32) {
    %c0_i32 = arith.constant 0 : i32
    %c0_i32_0 = arith.constant 0 : i32
    %c0_i32_1 = arith.constant 0 : i32
    return %c0_i32, %c0_i32_0 : i32, i32
  }
  func.func @transform_9(%arg0: i32) -> (i32, i32) {
    %c0_i32 = arith.constant 0 : i32
    %c0_i32_0 = arith.constant 0 : i32
    return %arg0, %c0_i32 : i32, i32
  }
}

</mosaic_0001>

<llo_original>
// kernel: manager_critic_forward.1
$region0: #{manager_critic_forward.1}
  #allocation0 [shape = 'u32[]', space=smem, size = 0x4, offset = 0x4, fixed_abs, tag = 'smem constant byte address 0x4 - core index']
  #allocation1 [shape = 'u32[144,128]{1,0:T(1,128)}', space=vmem, size = 0x12000, scoped, tag = 'internal scratch']
  %s0 = inlined_call_operand.vmem [shape: f32[8,32], index: 0, kind: input, shape index: {}]
  %s1 = inlined_call_operand.hbm [shape: bf16[32,768], index: 1, kind: input, shape index: {}]
  %s2 = inlined_call_operand.vmem [shape: f32[1,768], index: 2, kind: input, shape index: {}]
  %s3 = inlined_call_operand.hbm [shape: bf16[384,384], index: 3, kind: input, shape index: {}]
  %s4 = inlined_call_operand.vmem [shape: f32[1,384], index: 4, kind: input, shape index: {}]
  %s5 = inlined_call_operand.hbm [shape: bf16[384,384], index: 5, kind: input, shape index: {}]
  %s6 = inlined_call_operand.vmem [shape: f32[1,384], index: 6, kind: input, shape index: {}]
  %s7 = inlined_call_operand.hbm [shape: bf16[768,128], index: 7, kind: input, shape index: {}]
  %s8 = inlined_call_operand.vmem [shape: f32[1,128], index: 8, kind: input, shape index: {}]
  %s9 = inlined_call_operand.vmem [shape: f32[8,128], index: 9, kind: output, shape index: {}]
  %s10 = sld [smem:[#allocation0]]
  $region62: #{manager_critic_forward.1} parent=0
    _
  %s12 = ssub.s32 1, %s10
  %s13 = scalar_select 0, %s12, %s10
  $region1: #{manager_critic_forward.1} parent=0
    #allocation2 [shape = 'u8[49152]{0}', space=vmem, size = 0xc000, scoped, tag = 'input window, operand 1, single buffered']
    #allocation3 [shape = 's32[1]{0}', space=sflag, size = 0x4, scoped, tag = 'scoped memory for manager_critic_forward.1']
    #allocation4 [shape = 'u8[294912]{0}', space=vmem, size = 0x48000, scoped, tag = 'input window, operand 3, single buffered']
    #allocation5 [shape = 's32[1]{0}', space=sflag, size = 0x4, scoped, tag = 'scoped memory for manager_critic_forward.1']
    #allocation6 [shape = 'u8[294912]{0}', space=vmem, size = 0x48000, scoped, tag = 'input window, operand 5, single buffered']
    #allocation7 [shape = 'u8[196608]{0}', space=vmem, size = 0x30000, scoped, tag = 'input window, operand 7, single buffered']
    #allocation8 [shape = 's32[1]{0}', space=sflag, size = 0x4, scoped, tag = 'scoped memory for manager_critic_forward.1']
    %14 = vsyncpa [#allocation3], 0
    %15 = vsyncpa [#allocation5], 0
    %16 = vsyncpa [#allocation8], 0
    // Predicated region
    $region2: #{manager_critic_forward.1} parent=1 // pred_check
      _
    $region3: #{manager_critic_forward.1} parent=1 // pred_check_branch
      %18 = sbr.rel (0) target = $region5
    $region4: #{manager_critic_forward.1} parent=1 // pred_region
      _
    $region5: #{manager_critic_forward.1} parent=1 // pred_fallthru
      _
    // Predicated region
    $region6: #{manager_critic_forward.1} parent=1 // pred_check
      _
    $region7: #{manager_critic_forward.1} parent=1 // pred_check_branch
      %20 = sbr.rel (0) target = $region9
    $region8: #{manager_critic_forward.1} parent=1 // pred_region
      %s22 = ssub.s32 1536, 1536
      %23 = vsyncadd [#allocation3], %s22
      %s24 = sshll.u32 [#allocation2], 4
      %s25 = int_to_ptr.vmem [resolvable:$true] %s24
      %30 = dma.hbm_to_vmem [thread:$0]  %s1, 1536, %s25, [#allocation3], 384, 384, 24
    $region9: #{manager_critic_forward.1} parent=1 // pred_fallthru
      _
    // Predicated region
    $region10: #{manager_critic_forward.1} parent=1 // pred_check
      _
    $region11: #{manager_critic_forward.1} parent=1 // pred_check_branch
      %32 = sbr.rel (0) target = $region13
    $region12: #{manager_critic_forward.1} parent=1 // pred_region
      _
    $region13: #{manager_critic_forward.1} parent=1 // pred_fallthru
      _
    // Predicated region
    $region14: #{manager_critic_forward.1} parent=1 // pred_check
      _
    $region15: #{manager_critic_forward.1} parent=1 // pred_check_branch
      %34 = sbr.rel (0) target = $region17
    $region16: #{manager_critic_forward.1} parent=1 // pred_region
      %s36 = ssub.s32 9216, 9216
      %37 = vsyncadd [#allocation5], %s36
      %s38 = sshll.u32 [#allocation4], 4
      %s39 = int_to_ptr.vmem [resolvable:$true] %s38
      %44 = dma.hbm_to_vmem [thread:$0]  %s3, 9216, %s39, [#allocation5], 192, 192, 12
    $region17: #{manager_critic_forward.1} parent=1 // pred_fallthru
      _
    // Predicated region
    $region18: #{manager_critic_forward.1} parent=1 // pred_check
      _
    $region19: #{manager_critic_forward.1} parent=1 // pred_check_branch
      %46 = sbr.rel (0) target = $region21
    $region20: #{manager_critic_forward.1} parent=1 // pred_region
      _
    $region21: #{manager_critic_forward.1} parent=1 // pred_fallthru
      _
    // Predicated region
    $region22: #{manager_critic_forward.1} parent=1 // pred_check
      _
    $region23: #{manager_critic_forward.1} parent=1 // pred_check_branch
      %48 = sbr.rel (0) target = $region25
    $region24: #{manager_critic_forward.1} parent=1 // pred_region
      %s50 = ssub.s32 9216, 9216
      %51 = vsyncadd [#allocation5], %s50
      %s52 = sshll.u32 [#allocation6], 4
      %s53 = int_to_ptr.vmem [resolvable:$true] %s52
      %58 = dma.hbm_to_vmem [thread:$0]  %s5, 9216, %s53, [#allocation5], 192, 192, 12
    $region25: #{manager_critic_forward.1} parent=1 // pred_fallthru
      _
    // Predicated region
    $region26: #{manager_critic_forward.1} parent=1 // pred_check
      _
    $region27: #{manager_critic_forward.1} parent=1 // pred_check_branch
      %60 = sbr.rel (0) target = $region29
    $region28: #{manager_critic_forward.1} parent=1 // pred_region
      _
    $region29: #{manager_critic_forward.1} parent=1 // pred_fallthru
      _
    // Predicated region
    $region30: #{manager_critic_forward.1} parent=1 // pred_check
      _
    $region31: #{manager_critic_forward.1} parent=1 // pred_check_branch
      %62 = sbr.rel (0) target = $region33
    $region32: #{manager_critic_forward.1} parent=1 // pred_region
      %s64 = ssub.s32 6144, 6144
      %65 = vsyncadd [#allocation8], %s64
      %s66 = sshll.u32 [#allocation7], 4
      %s67 = int_to_ptr.vmem [resolvable:$true] %s66
      %72 = dma.hbm_to_vmem [thread:$0]  %s7, 6144, %s67, [#allocation8], 64, 64, 4
    $region33: #{manager_critic_forward.1} parent=1 // pred_fallthru
      _
    // Predicated region
    $region34: #{manager_critic_forward.1} parent=1 // pred_check
      _
    $region35: #{manager_critic_forward.1} parent=1 // pred_check_branch
      %74 = sbr.rel (0) target = $region37
    $region36: #{manager_critic_forward.1} parent=1 // pred_region
      _
    $region37: #{manager_critic_forward.1} parent=1 // pred_fallthru
      _
    // Predicated region
    $region38: #{manager_critic_forward.1} parent=1 // pred_check
      _
    $region39: #{manager_critic_forward.1} parent=1 // pred_check_branch
      %76 = sbr.rel (0) target = $region41
    $region40: #{manager_critic_forward.1} parent=1 // pred_region
      %77 = dma.done [#allocation3], 1536
    $region41: #{manager_critic_forward.1} parent=1 // pred_fallthru
      _
    // Predicated region
    $region42: #{manager_critic_forward.1} parent=1 // pred_check
      _
    $region43: #{manager_critic_forward.1} parent=1 // pred_check_branch
      %79 = sbr.rel (0) target = $region45
    $region44: #{manager_critic_forward.1} parent=1 // pred_region
      %80 = dma.done [#allocation5], 9216
    $region45: #{manager_critic_forward.1} parent=1 // pred_fallthru
      _
    // Predicated region
    $region46: #{manager_critic_forward.1} parent=1 // pred_check
      _
    $region47: #{manager_critic_forward.1} parent=1 // pred_check_branch
      %82 = sbr.rel (0) target = $region49
    $region48: #{manager_critic_forward.1} parent=1 // pred_region
      %83 = dma.done [#allocation5], 9216
    $region49: #{manager_critic_forward.1} parent=1 // pred_fallthru
      _
    // Predicated region
    $region50: #{manager_critic_forward.1} parent=1 // pred_check
      _
    $region51: #{manager_critic_forward.1} parent=1 // pred_check_branch
      %85 = sbr.rel (0) target = $region53
    $region52: #{manager_critic_forward.1} parent=1 // pred_region
      %86 = dma.done [#allocation8], 6144
    $region53: #{manager_critic_forward.1} parent=1 // pred_fallthru
      _
    %v88 = vld [vmem:[%s0] sm:$0xff]
    %v89 = vpack.c.bf16 %v88, %v88
    %v90 = vld [vmem:[#allocation2] sm:$0xff]
    %v91 = vld [vmem:[#allocation2 + $0x8] sm:$0xff]
    %v92 = vld [vmem:[#allocation2 + $0x10] sm:$0xff]
    %v93 = vld [vmem:[#allocation2 + $0x18] sm:$0xff]
    %v94 = vld [vmem:[#allocation2 + $0x20] sm:$0xff]
    %v95 = vld [vmem:[#allocation2 + $0x28] sm:$0xff]
    %v96 = vld [vmem:[#allocation2 + $0x30] sm:$0xff]
    %v97 = vld [vmem:[#allocation2 + $0x38] sm:$0xff]
    %v98 = vld [vmem:[#allocation2 + $0x40] sm:$0xff]
    %v99 = vld [vmem:[#allocation2 + $0x48] sm:$0xff]
    %v100 = vld [vmem:[#allocation2 + $0x50] sm:$0xff]
    %v101 = vld [vmem:[#allocation2 + $0x58] sm:$0xff]
    %v102 = vld [vmem:[%s2] sm:$0x3f]
    %v104 = vlaneseq
    %v105 = vshrl.u32 %v104, 7
    %v106 = vsub.s32 0, %v105
    %v107 = vrot.slane %v102, %v106
    %v108 = vlaneseq
    %v109 = vshrl.u32 %v108, 7
    %v110 = vsub.s32 1, %v109
    %v111 = vrot.slane %v102, %v110
    %v112 = vlaneseq
    %v113 = vshrl.u32 %v112, 7
    %v114 = vsub.s32 2, %v113
    %v115 = vrot.slane %v102, %v114
    %v116 = vlaneseq
    %v117 = vshrl.u32 %v116, 7
    %v118 = vsub.s32 3, %v117
    %v119 = vrot.slane %v102, %v118
    %v120 = vlaneseq
    %v121 = vshrl.u32 %v120, 7
    %v122 = vsub.s32 4, %v121
    %v123 = vrot.slane %v102, %v122
    %v124 = vlaneseq
    %v125 = vshrl.u32 %v124, 7
    %v126 = vsub.s32 5, %v125
    %v127 = vrot.slane %v102, %v126
    %v146 = vunpack.c.l.b16 %v90
    %v147 = vunpack.c.h.b16 %v90
    %v148 = vunpack.c.l.b16 %v91
    %v149 = vunpack.c.h.b16 %v91
    %v150 = vunpack.c.l.b16 %v92
    %v151 = vunpack.c.h.b16 %v92
    %v152 = vunpack.c.l.b16 %v93
    %v153 = vunpack.c.h.b16 %v93
    %v154 = vunpack.c.l.b16 %v94
    %v155 = vunpack.c.h.b16 %v94
    %v156 = vunpack.c.l.b16 %v95
    %v157 = vunpack.c.h.b16 %v95
    %v158 = vunpack.c.l.b16 %v96
    %v159 = vunpack.c.h.b16 %v96
    %v160 = vunpack.c.l.b16 %v97
    %v161 = vunpack.c.h.b16 %v97
    %v162 = vunpack.c.l.b16 %v98
    %v163 = vunpack.c.h.b16 %v98
    %v164 = vunpack.c.l.b16 %v99
    %v165 = vunpack.c.h.b16 %v99
    %v166 = vunpack.c.l.b16 %v100
    %v167 = vunpack.c.h.b16 %v100
    %v168 = vunpack.c.l.b16 %v101
    %v169 = vunpack.c.h.b16 %v101
    %v170 = vpack.c.b16 %v152, %v146
    %v171 = vpack.c.b16 %v153, %v147
    %v172 = vpack.c.b16 %v154, %v148
    %v173 = vpack.c.b16 %v155, %v149
    %v174 = vpack.c.b16 %v156, %v150
    %v175 = vpack.c.b16 %v157, %v151
    %v176 = vpack.c.b16 %v164, %v158
    %v177 = vpack.c.b16 %v165, %v159
    %v178 = vpack.c.b16 %v166, %v160
    %v179 = vpack.c.b16 %v167, %v161
    %v180 = vpack.c.b16 %v168, %v162
    %v181 = vpack.c.b16 %v169, %v163
    %vm194 = vcmask 261120
    %v196 = vsel %vm194, %v89, 0
    %198 = vmatprep.subr.bf16.mxu0 0
    %199 = vmatpush1.bf16.msra.mxu0 0
    %200 = vmatprep.subr.bf16.mxu0 0
    %201 = vmatpush1.bf16.msra.mxu0 0
    %202 = vmatprep.subr.bf16.mxu0 0
    %203 = vmatpush1.bf16.msra.mxu0 0
    %204 = vmatprep.subr.bf16.mxu0 0
    %205 = vmatpush1.bf16.msra.mxu0 0
    %206 = vmatprep.subr.bf16.mxu0 0
    %207 = vmatpush1.bf16.msra.mxu0 0
    %208 = vmatprep.subr.bf16.mxu0 0
    %209 = vmatpush1.bf16.msra.mxu0 0
    %210 = vmatprep.subr.bf16.mxu0 %v177
    %211 = vmatpush1.bf16.msra.mxu0 %v176
    %212 = vmatprep.subr.bf16.mxu0 %v171
    %213 = vmatpush1.bf16.msra.mxu0 %v170
    %214 = vmatprep.subr.bf16.mxu0 0
    %215 = vmatpush2.bf16.msra.mxu0 0
    %216 = vmatprep.subr.bf16.mxu0 0
    %217 = vmatpush2.bf16.msra.mxu0 0
    %218 = vmatprep.subr.bf16.mxu0 0
    %219 = vmatpush2.bf16.msra.mxu0 0
    %220 = vmatprep.subr.bf16.mxu0 0
    %221 = vmatpush2.bf16.msra.mxu0 0
    %222 = vmatprep.subr.bf16.mxu0 0
    %223 = vmatpush2.bf16.msra.mxu0 0
    %224 = vmatprep.subr.bf16.mxu0 0
    %225 = vmatpush2.bf16.msra.mxu0 0
    %226 = vmatprep.subr.bf16.mxu0 0
    %227 = vmatpush2.bf16.msra.mxu0 0
    %228 = vmatprep.subr.bf16.mxu0 0
    %229 = vmatpush2.bf16.msra.mxu0 0
    %230 = vmatprep.mubr.bf16.mxu0 0
    %231 = vmatmul.mubr.bf16.gmra.mxu0 %v196
    %v232 = vpop.f32.mrf.mxu0
    %v233 = vadd.f32 %v107, %v232
    %v234 = vpop.f32.mrf.mxu0
    %v235 = vadd.f32 %v111, %v234
    %v236 = vpop.f32.mrf.mxu0
    %v237 = vpop.f32.mrf.mxu0
    %238 = vdwg.mxu0
    %239 = vmatprep.subr.bf16.mxu0 0
    %240 = vmatpush1.bf16.msra.mxu0 0
    %241 = vmatprep.subr.bf16.mxu0 0
    %242 = vmatpush1.bf16.msra.mxu0 0
    %243 = vmatprep.subr.bf16.mxu0 0
    %244 = vmatpush1.bf16.msra.mxu0 0
    %245 = vmatprep.subr.bf16.mxu0 0
    %246 = vmatpush1.bf16.msra.mxu0 0
    %247 = vmatprep.subr.bf16.mxu0 0
    %248 = vmatpush1.bf16.msra.mxu0 0
    %249 = vmatprep.subr.bf16.mxu0 0
    %250 = vmatpush1.bf16.msra.mxu0 0
    %251 = vmatprep.subr.bf16.mxu0 %v179
    %252 = vmatpush1.bf16.msra.mxu0 %v178
    %253 = vmatprep.subr.bf16.mxu0 %v173
    %254 = vmatpush1.bf16.msra.mxu0 %v172
    %255 = vmatprep.subr.bf16.mxu0 0
    %256 = vmatpush2.bf16.msra.mxu0 0
    %257 = vmatprep.subr.bf16.mxu0 0
    %258 = vmatpush2.bf16.msra.mxu0 0
    %259 = vmatprep.subr.bf16.mxu0 0
    %260 = vmatpush2.bf16.msra.mxu0 0
    %261 = vmatprep.subr.bf16.mxu0 0
    %262 = vmatpush2.bf16.msra.mxu0 0
    %263 = vmatprep.subr.bf16.mxu0 0
    %264 = vmatpush2.bf16.msra.mxu0 0
    %265 = vmatprep.subr.bf16.mxu0 0
    %266 = vmatpush2.bf16.msra.mxu0 0
    %267 = vmatprep.subr.bf16.mxu0 0
    %268 = vmatpush2.bf16.msra.mxu0 0
    %269 = vmatprep.subr.bf16.mxu0 0
    %270 = vmatpush2.bf16.msra.mxu0 0
    %271 = vmatprep.mubr.bf16.mxu0 0
    %272 = vmatmul.mubr.bf16.gmra.mxu0 %v196
    %v273 = vpop.f32.mrf.mxu0
    %v274 = vadd.f32 %v115, %v273
    %v275 = vpop.f32.mrf.mxu0
    %v276 = vadd.f32 %v119, %v275
    %v277 = vpop.f32.mrf.mxu0
    %v278 = vpop.f32.mrf.mxu0
    %279 = vdwg.mxu0
    %280 = vmatprep.subr.bf16.mxu0 0
    %281 = vmatpush1.bf16.msra.mxu0 0
    %282 = vmatprep.subr.bf16.mxu0 0
    %283 = vmatpush1.bf16.msra.mxu0 0
    %284 = vmatprep.subr.bf16.mxu0 0
    %285 = vmatpush1.bf16.msra.mxu0 0
    %286 = vmatprep.subr.bf16.mxu0 0
    %287 = vmatpush1.bf16.msra.mxu0 0
    %288 = vmatprep.subr.bf16.mxu0 0
    %289 = vmatpush1.bf16.msra.mxu0 0
    %290 = vmatprep.subr.bf16.mxu0 0
    %291 = vmatpush1.bf16.msra.mxu0 0
    %292 = vmatprep.subr.bf16.mxu0 %v181
    %293 = vmatpush1.bf16.msra.mxu0 %v180
    %294 = vmatprep.subr.bf16.mxu0 %v175
    %295 = vmatpush1.bf16.msra.mxu0 %v174
    %296 = vmatprep.subr.bf16.mxu0 0
    %297 = vmatpush2.bf16.msra.mxu0 0
    %298 = vmatprep.subr.bf16.mxu0 0
    %299 = vmatpush2.bf16.msra.mxu0 0
    %300 = vmatprep.subr.bf16.mxu0 0
    %301 = vmatpush2.bf16.msra.mxu0 0
    %302 = vmatprep.subr.bf16.mxu0 0
    %303 = vmatpush2.bf16.msra.mxu0 0
    %304 = vmatprep.subr.bf16.mxu0 0
    %305 = vmatpush2.bf16.msra.mxu0 0
    %306 = vmatprep.subr.bf16.mxu0 0
    %307 = vmatpush2.bf16.msra.mxu0 0
    %308 = vmatprep.subr.bf16.mxu0 0
    %309 = vmatpush2.bf16.msra.mxu0 0
    %310 = vmatprep.subr.bf16.mxu0 0
    %311 = vmatpush2.bf16.msra.mxu0 0
    %312 = vmatprep.mubr.bf16.mxu0 0
    %313 = vmatmul.mubr.bf16.gmra.mxu0 %v196
    %v314 = vpop.f32.mrf.mxu0
    %v315 = vadd.f32 %v123, %v314
    %v316 = vpop.f32.mrf.mxu0
    %v317 = vadd.f32 %v127, %v316
    %v318 = vpop.f32.mrf.mxu0
    %v319 = vpop.f32.mrf.mxu0
    %320 = vdwg.mxu0
    %v321 = vmax.f32 %v233, 0.0
    %v322 = vmax.f32 %v235, 0.0
    %v323 = vmax.f32 %v274, 0.0
    %v324 = vmax.f32 %v276, 0.0
    %v325 = vmax.f32 %v315, 0.0
    %v326 = vmax.f32 %v317, 0.0
    %v327 = vpack.c.bf16 %v321, %v321
    %v328 = vpack.c.bf16 %v322, %v322
    %v329 = vpack.c.bf16 %v323, %v323
    %v330 = vpack.c.bf16 %v324, %v324
    %v331 = vpack.c.bf16 %v325, %v325
    %v332 = vpack.c.bf16 %v326, %v326
    %v333 = vld [vmem:[#allocation4] sm:$0xff]
    %v334 = vld [vmem:[#allocation4 + $0x8] sm:$0xf]
    %v335 = vld [vmem:[#allocation4 + $0xc] sm:$0xff]
    %v336 = vld [vmem:[#allocation4 + $0x14] sm:$0xf]
    %v337 = vld [vmem:[#allocation4 + $0x18] sm:$0xff]
    %v338 = vld [vmem:[#allocation4 + $0x20] sm:$0xf]
    %v339 = vld [vmem:[#allocation4 + $0x24] sm:$0xff]
    %v340 = vld [vmem:[#allocation4 + $0x2c] sm:$0xf]
    %v341 = vld [vmem:[#allocation4 + $0x30] sm:$0xff]
    %v342 = vld [vmem:[#allocation4 + $0x38] sm:$0xf]
    %v343 = vld [vmem:[#allocation4 + $0x3c] sm:$0xff]
    %v344 = vld [vmem:[#allocation4 + $0x44] sm:$0xf]
    %v345 = vld [vmem:[#allocation4 + $0x48] sm:$0xff]
    %v346 = vld [vmem:[#allocation4 + $0x50] sm:$0xf]
    %v347 = vld [vmem:[#allocation4 + $0x54] sm:$0xff]
    %v348 = vld [vmem:[#allocation4 + $0x5c] sm:$0xf]
    %v349 = vld [vmem:[#allocation4 + $0x60] sm:$0xff]
    %v350 = vld [vmem:[#allocation4 + $0x68] sm:$0xf]
    %v351 = vld [vmem:[#allocation4 + $0x6c] sm:$0xff]
    %v352 = vld [vmem:[#allocation4 + $0x74] sm:$0xf]
    %v353 = vld [vmem:[#allocation4 + $0x78] sm:$0xff]
    %v354 = vld [vmem:[#allocation4 + $0x80] sm:$0xf]
    %v355 = vld [vmem:[#allocation4 + $0x84] sm:$0xff]
    %v356 = vld [vmem:[#allocation4 + $0x8c] sm:$0xf]
    %v357 = vld [vmem:[#allocation4 + $0x90] sm:$0xff]
    %v358 = vld [vmem:[#allocation4 + $0x98] sm:$0xf]
    %v359 = vld [vmem:[#allocation4 + $0x9c] sm:$0xff]
    %v360 = vld [vmem:[#allocation4 + $0xa4] sm:$0xf]
    %v361 = vld [vmem:[#allocation4 + $0xa8] sm:$0xff]
    %v362 = vld [vmem:[#allocation4 + $0xb0] sm:$0xf]
    %v363 = vld [vmem:[#allocation4 + $0xb4] sm:$0xff]
    %v364 = vld [vmem:[#allocation4 + $0xbc] sm:$0xf]
    %v365 = vld [vmem:[#allocation4 + $0xc0] sm:$0xff]
    %v366 = vld [vmem:[#allocation4 + $0xc8] sm:$0xf]
    %v367 = vld [vmem:[#allocation4 + $0xcc] sm:$0xff]
    %v368 = vld [vmem:[#allocation4 + $0xd4] sm:$0xf]
    %v369 = vld [vmem:[#allocation4 + $0xd8] sm:$0xff]
    %v370 = vld [vmem:[#allocation4 + $0xe0] sm:$0xf]
    %v371 = vld [vmem:[#allocation4 + $0xe4] sm:$0xff]
    %v372 = vld [vmem:[#allocation4 + $0xec] sm:$0xf]
    %v373 = vld [vmem:[#allocation4 + $0xf0] sm:$0xff]
    %v374 = vld [vmem:[#allocation4 + $0xf8] sm:$0xf]
    %v375 = vld [vmem:[#allocation4 + $0xfc] sm:$0xff]
    %v376 = vld [vmem:[#allocation4 + $0x104] sm:$0xf]
    %v377 = vld [vmem:[#allocation4 + $0x108] sm:$0xff]
    %v378 = vld [vmem:[#allocation4 + $0x110] sm:$0xf]
    %v379 = vld [vmem:[#allocation4 + $0x114] sm:$0xff]
    %v380 = vld [vmem:[#allocation4 + $0x11c] sm:$0xf]
    %v381 = vld [vmem:[#allocation4 + $0x120] sm:$0xff]
    %v382 = vld [vmem:[#allocation4 + $0x128] sm:$0xf]
    %v383 = vld [vmem:[#allocation4 + $0x12c] sm:$0xff]
    %v384 = vld [vmem:[#allocation4 + $0x134] sm:$0xf]
    %v385 = vld [vmem:[#allocation4 + $0x138] sm:$0xff]
    %v386 = vld [vmem:[#allocation4 + $0x140] sm:$0xf]
    %v387 = vld [vmem:[#allocation4 + $0x144] sm:$0xff]
    %v388 = vld [vmem:[#allocation4 + $0x14c] sm:$0xf]
    %v389 = vld [vmem:[#allocation4 + $0x150] sm:$0xff]
    %v390 = vld [vmem:[#allocation4 + $0x158] sm:$0xf]
    %v391 = vld [vmem:[#allocation4 + $0x15c] sm:$0xff]
    %v392 = vld [vmem:[#allocation4 + $0x164] sm:$0xf]
    %v393 = vld [vmem:[#allocation4 + $0x168] sm:$0xff]
    %v394 = vld [vmem:[#allocation4 + $0x170] sm:$0xf]
    %v395 = vld [vmem:[#allocation4 + $0x174] sm:$0xff]
    %v396 = vld [vmem:[#allocation4 + $0x17c] sm:$0xf]
    %v397 = vld [vmem:[#allocation4 + $0x180] sm:$0xff]
    %v398 = vld [vmem:[#allocation4 + $0x188] sm:$0xf]
    %v399 = vld [vmem:[#allocation4 + $0x18c] sm:$0xff]
    %v400 = vld [vmem:[#allocation4 + $0x194] sm:$0xf]
    %v401 = vld [vmem:[#allocation4 + $0x198] sm:$0xff]
    %v402 = vld [vmem:[#allocation4 + $0x1a0] sm:$0xf]
    %v403 = vld [vmem:[#allocation4 + $0x1a4] sm:$0xff]
    %v404 = vld [vmem:[#allocation4 + $0x1ac] sm:$0xf]
    %v405 = vld [vmem:[#allocation4 + $0x1b0] sm:$0xff]
    %v406 = vld [vmem:[#allocation4 + $0x1b8] sm:$0xf]
    %v407 = vld [vmem:[#allocation4 + $0x1bc] sm:$0xff]
    %v408 = vld [vmem:[#allocation4 + $0x1c4] sm:$0xf]
    %v409 = vld [vmem:[#allocation4 + $0x1c8] sm:$0xff]
    %v410 = vld [vmem:[#allocation4 + $0x1d0] sm:$0xf]
    %v411 = vld [vmem:[#allocation4 + $0x1d4] sm:$0xff]
    %v412 = vld [vmem:[#allocation4 + $0x1dc] sm:$0xf]
    %v413 = vld [vmem:[#allocation4 + $0x1e0] sm:$0xff]
    %v414 = vld [vmem:[#allocation4 + $0x1e8] sm:$0xf]
    %v415 = vld [vmem:[#allocation4 + $0x1ec] sm:$0xff]
    %v416 = vld [vmem:[#allocation4 + $0x1f4] sm:$0xf]
    %v417 = vld [vmem:[#allocation4 + $0x1f8] sm:$0xff]
    %v418 = vld [vmem:[#allocation4 + $0x200] sm:$0xf]
    %v419 = vld [vmem:[#allocation4 + $0x204] sm:$0xff]
    %v420 = vld [vmem:[#allocation4 + $0x20c] sm:$0xf]
    %v421 = vld [vmem:[#allocation4 + $0x210] sm:$0xff]
    %v422 = vld [vmem:[#allocation4 + $0x218] sm:$0xf]
    %v423 = vld [vmem:[#allocation4 + $0x21c] sm:$0xff]
    %v424 = vld [vmem:[#allocation4 + $0x224] sm:$0xf]
    %v425 = vld [vmem:[#allocation4 + $0x228] sm:$0xff]
    %v426 = vld [vmem:[#allocation4 + $0x230] sm:$0xf]
    %v427 = vld [vmem:[#allocation4 + $0x234] sm:$0xff]
    %v428 = vld [vmem:[#allocation4 + $0x23c] sm:$0xf]
    %v429 = vld [vmem:[%s4] sm:$0x7]
    %v431 = vlaneseq
    %v432 = vshrl.u32 %v431, 7
    %v433 = vsub.s32 0, %v432
    %v434 = vrot.slane %v429, %v433
    %v435 = vlaneseq
    %v436 = vshrl.u32 %v435, 7
    %v437 = vsub.s32 1, %v436
    %v438 = vrot.slane %v429, %v437
    %v439 = vlaneseq
    %v440 = vshrl.u32 %v439, 7
    %v441 = vsub.s32 2, %v440
    %v442 = vrot.slane %v429, %v441
    %v542 = vunpack.c.l.b16 %v333
    %v543 = vunpack.c.h.b16 %v333
    %v544 = vunpack.c.l.b16 %v334
    %v545 = vunpack.c.l.b16 %v335
    %v546 = vunpack.c.h.b16 %v335
    %v547 = vunpack.c.l.b16 %v336
    %v548 = vunpack.c.l.b16 %v337
    %v549 = vunpack.c.h.b16 %v337
    %v550 = vunpack.c.l.b16 %v338
    %v551 = vunpack.c.l.b16 %v339
    %v552 = vunpack.c.h.b16 %v339
    %v553 = vunpack.c.l.b16 %v340
    %v554 = vunpack.c.l.b16 %v341
    %v555 = vunpack.c.h.b16 %v341
    %v556 = vunpack.c.l.b16 %v342
    %v557 = vunpack.c.l.b16 %v343
    %v558 = vunpack.c.h.b16 %v343
    %v559 = vunpack.c.l.b16 %v344
    %v560 = vunpack.c.l.b16 %v345
    %v561 = vunpack.c.h.b16 %v345
    %v562 = vunpack.c.l.b16 %v346
    %v563 = vunpack.c.l.b16 %v347
    %v564 = vunpack.c.h.b16 %v347
    %v565 = vunpack.c.l.b16 %v348
    %v566 = vunpack.c.l.b16 %v349
    %v567 = vunpack.c.h.b16 %v349
    %v568 = vunpack.c.l.b16 %v350
    %v569 = vunpack.c.l.b16 %v351
    %v570 = vunpack.c.h.b16 %v351
    %v571 = vunpack.c.l.b16 %v352
    %v572 = vunpack.c.l.b16 %v353
    %v573 = vunpack.c.h.b16 %v353
    %v574 = vunpack.c.l.b16 %v354
    %v575 = vunpack.c.l.b16 %v355
    %v576 = vunpack.c.h.b16 %v355
    %v577 = vunpack.c.l.b16 %v356
    %v578 = vunpack.c.l.b16 %v357
    %v579 = vunpack.c.h.b16 %v357
    %v580 = vunpack.c.l.b16 %v358
    %v581 = vunpack.c.l.b16 %v359
    %v582 = vunpack.c.h.b16 %v359
    %v583 = vunpack.c.l.b16 %v360
    %v584 = vunpack.c.l.b16 %v361
    %v585 = vunpack.c.h.b16 %v361
    %v586 = vunpack.c.l.b16 %v362
    %v587 = vunpack.c.l.b16 %v363
    %v588 = vunpack.c.h.b16 %v363
    %v589 = vunpack.c.l.b16 %v364
    %v590 = vunpack.c.l.b16 %v365
    %v591 = vunpack.c.h.b16 %v365
    %v592 = vunpack.c.l.b16 %v366
    %v593 = vunpack.c.l.b16 %v367
    %v594 = vunpack.c.h.b16 %v367
    %v595 = vunpack.c.l.b16 %v368
    %v596 = vunpack.c.l.b16 %v369
    %v597 = vunpack.c.h.b16 %v369
    %v598 = vunpack.c.l.b16 %v370
    %v599 = vunpack.c.l.b16 %v371
    %v600 = vunpack.c.h.b16 %v371
    %v601 = vunpack.c.l.b16 %v372
    %v602 = vunpack.c.l.b16 %v373
    %v603 = vunpack.c.h.b16 %v373
    %v604 = vunpack.c.l.b16 %v374
    %v605 = vunpack.c.l.b16 %v375
    %v606 = vunpack.c.h.b16 %v375
    %v607 = vunpack.c.l.b16 %v376
    %v608 = vunpack.c.l.b16 %v377
    %v609 = vunpack.c.h.b16 %v377
    %v610 = vunpack.c.l.b16 %v378
    %v611 = vunpack.c.l.b16 %v379
    %v612 = vunpack.c.h.b16 %v379
    %v613 = vunpack.c.l.b16 %v380
    %v614 = vunpack.c.l.b16 %v381
    %v615 = vunpack.c.h.b16 %v381
    %v616 = vunpack.c.l.b16 %v382
    %v617 = vunpack.c.l.b16 %v383
    %v618 = vunpack.c.h.b16 %v383
    %v619 = vunpack.c.l.b16 %v384
    %v620 = vunpack.c.l.b16 %v385
    %v621 = vunpack.c.h.b16 %v385
    %v622 = vunpack.c.l.b16 %v386
    %v623 = vunpack.c.l.b16 %v387
    %v624 = vunpack.c.h.b16 %v387
    %v625 = vunpack.c.l.b16 %v388
    %v626 = vunpack.c.l.b16 %v389
    %v627 = vunpack.c.h.b16 %v389
    %v628 = vunpack.c.l.b16 %v390
    %v629 = vunpack.c.l.b16 %v391
    %v630 = vunpack.c.h.b16 %v391
    %v631 = vunpack.c.l.b16 %v392
    %v632 = vunpack.c.l.b16 %v393
    %v633 = vunpack.c.h.b16 %v393
    %v634 = vunpack.c.l.b16 %v394
    %v635 = vunpack.c.l.b16 %v395
    %v636 = vunpack.c.h.b16 %v395
    %v637 = vunpack.c.l.b16 %v396
    %v638 = vunpack.c.l.b16 %v397
    %v639 = vunpack.c.h.b16 %v397
    %v640 = vunpack.c.l.b16 %v398
    %v641 = vunpack.c.l.b16 %v399
    %v642 = vunpack.c.h.b16 %v399
    %v643 = vunpack.c.l.b16 %v400
    %v644 = vunpack.c.l.b16 %v401
    %v645 = vunpack.c.h.b16 %v401
    %v646 = vunpack.c.l.b16 %v402
    %v647 = vunpack.c.l.b16 %v403
    %v648 = vunpack.c.h.b16 %v403
    %v649 = vunpack.c.l.b16 %v404
    %v650 = vunpack.c.l.b16 %v405
    %v651 = vunpack.c.h.b16 %v405
    %v652 = vunpack.c.l.b16 %v406
    %v653 = vunpack.c.l.b16 %v407
    %v654 = vunpack.c.h.b16 %v407
    %v655 = vunpack.c.l.b16 %v408
    %v656 = vunpack.c.l.b16 %v409
    %v657 = vunpack.c.h.b16 %v409
    %v658 = vunpack.c.l.b16 %v410
    %v659 = vunpack.c.l.b16 %v411
    %v660 = vunpack.c.h.b16 %v411
    %v661 = vunpack.c.l.b16 %v412
    %v662 = vunpack.c.l.b16 %v413
    %v663 = vunpack.c.h.b16 %v413
    %v664 = vunpack.c.l.b16 %v414
    %v665 = vunpack.c.l.b16 %v415
    %v666 = vunpack.c.h.b16 %v415
    %v667 = vunpack.c.l.b16 %v416
    %v668 = vunpack.c.l.b16 %v417
    %v669 = vunpack.c.h.b16 %v417
    %v670 = vunpack.c.l.b16 %v418
    %v671 = vunpack.c.l.b16 %v419
    %v672 = vunpack.c.h.b16 %v419
    %v673 = vunpack.c.l.b16 %v420
    %v674 = vunpack.c.l.b16 %v421
    %v675 = vunpack.c.h.b16 %v421
    %v676 = vunpack.c.l.b16 %v422
    %v677 = vunpack.c.l.b16 %v423
    %v678 = vunpack.c.h.b16 %v423
    %v679 = vunpack.c.l.b16 %v424
    %v680 = vunpack.c.l.b16 %v425
    %v681 = vunpack.c.h.b16 %v425
    %v682 = vunpack.c.l.b16 %v426
    %v683 = vunpack.c.l.b16 %v427
    %v684 = vunpack.c.h.b16 %v427
    %v685 = vunpack.c.l.b16 %v428
    %v686 = vpack.c.b16 %v545, %v542
    %v687 = vpack.c.b16 %v546, %v543
    %v688 = vpack.c.b16 %v547, %v544
    %v689 = vpack.c.b16 %v551, %v548
    %v690 = vpack.c.b16 %v552, %v549
    %v691 = vpack.c.b16 %v553, %v550
    %v692 = vpack.c.b16 %v557, %v554
    %v693 = vpack.c.b16 %v558, %v555
    %v694 = vpack.c.b16 %v559, %v556
    %v695 = vpack.c.b16 %v563, %v560
    %v696 = vpack.c.b16 %v564, %v561
    %v697 = vpack.c.b16 %v565, %v562
    %v698 = vpack.c.b16 %v569, %v566
    %v699 = vpack.c.b16 %v570, %v567
    %v700 = vpack.c.b16 %v571, %v568
    %v701 = vpack.c.b16 %v575, %v572
    %v702 = vpack.c.b16 %v576, %v573
    %v703 = vpack.c.b16 %v577, %v574
    %v704 = vpack.c.b16 %v581, %v578
    %v705 = vpack.c.b16 %v582, %v579
    %v706 = vpack.c.b16 %v583, %v580
    %v707 = vpack.c.b16 %v587, %v584
    %v708 = vpack.c.b16 %v588, %v585
    %v709 = vpack.c.b16 %v589, %v586
    %v710 = vpack.c.b16 %v593, %v590
    %v711 = vpack.c.b16 %v594, %v591
    %v712 = vpack.c.b16 %v595, %v592
    %v713 = vpack.c.b16 %v599, %v596
    %v714 = vpack.c.b16 %v600, %v597
    %v715 = vpack.c.b16 %v601, %v598
    %v716 = vpack.c.b16 %v605, %v602
    %v717 = vpack.c.b16 %v606, %v603
    %v718 = vpack.c.b16 %v607, %v604
    %v719 = vpack.c.b16 %v611, %v608
    %v720 = vpack.c.b16 %v612, %v609
    %v721 = vpack.c.b16 %v613, %v610
    %v722 = vpack.c.b16 %v617, %v614
    %v723 = vpack.c.b16 %v618, %v615
    %v724 = vpack.c.b16 %v619, %v616
    %v725 = vpack.c.b16 %v623, %v620
    %v726 = vpack.c.b16 %v624, %v621
    %v727 = vpack.c.b16 %v625, %v622
    %v728 = vpack.c.b16 %v629, %v626
    %v729 = vpack.c.b16 %v630, %v627
    %v730 = vpack.c.b16 %v631, %v628
    %v731 = vpack.c.b16 %v635, %v632
    %v732 = vpack.c.b16 %v636, %v633
    %v733 = vpack.c.b16 %v637, %v634
    %v734 = vpack.c.b16 %v641, %v638
    %v735 = vpack.c.b16 %v642, %v639
    %v736 = vpack.c.b16 %v643, %v640
    %v737 = vpack.c.b16 %v647, %v644
    %v738 = vpack.c.b16 %v648, %v645
    %v739 = vpack.c.b16 %v649, %v646
    %v740 = vpack.c.b16 %v653, %v650
    %v741 = vpack.c.b16 %v654, %v651
    %v742 = vpack.c.b16 %v655, %v652
    %v743 = vpack.c.b16 %v659, %v656
    %v744 = vpack.c.b16 %v660, %v657
    %v745 = vpack.c.b16 %v661, %v658
    %v746 = vpack.c.b16 %v665, %v662
    %v747 = vpack.c.b16 %v666, %v663
    %v748 = vpack.c.b16 %v667, %v664
    %v749 = vpack.c.b16 %v671, %v668
    %v750 = vpack.c.b16 %v672, %v669
    %v751 = vpack.c.b16 %v673, %v670
    %v752 = vpack.c.b16 %v677, %v674
    %v753 = vpack.c.b16 %v678, %v675
    %v754 = vpack.c.b16 %v679, %v676
    %v755 = vpack.c.b16 %v683, %v680
    %v756 = vpack.c.b16 %v684, %v681
    %v757 = vpack.c.b16 %v685, %v682
    %830 = vmatprep.subr.bf16.mxu0 %v708
    %831 = vmatpush1.bf16.msra.mxu0 %v707
    %832 = vmatprep.subr.bf16.mxu0 %v705
    %833 = vmatpush1.bf16.msra.mxu0 %v704
    %834 = vmatprep.subr.bf16.mxu0 %v702
    %835 = vmatpush1.bf16.msra.mxu0 %v701
    %836 = vmatprep.subr.bf16.mxu0 %v699
    %837 = vmatpush1.bf16.msra.mxu0 %v698
    %838 = vmatprep.subr.bf16.mxu0 %v696
    %839 = vmatpush1.bf16.msra.mxu0 %v695
    %840 = vmatprep.subr.bf16.mxu0 %v693
    %841 = vmatpush1.bf16.msra.mxu0 %v692
    %842 = vmatprep.subr.bf16.mxu0 %v690
    %843 = vmatpush1.bf16.msra.mxu0 %v689
    %844 = vmatprep.subr.bf16.mxu0 %v687
    %845 = vmatpush1.bf16.msra.mxu0 %v686
    %846 = vmatprep.subr.bf16.mxu0 %v732
    %847 = vmatpush2.bf16.msra.mxu0 %v731
    %848 = vmatprep.subr.bf16.mxu0 %v729
    %849 = vmatpush2.bf16.msra.mxu0 %v728
    %850 = vmatprep.subr.bf16.mxu0 %v726
    %851 = vmatpush2.bf16.msra.mxu0 %v725
    %852 = vmatprep.subr.bf16.mxu0 %v723
    %853 = vmatpush2.bf16.msra.mxu0 %v722
    %854 = vmatprep.subr.bf16.mxu0 %v720
    %855 = vmatpush2.bf16.msra.mxu0 %v719
    %856 = vmatprep.subr.bf16.mxu0 %v717
    %857 = vmatpush2.bf16.msra.mxu0 %v716
    %858 = vmatprep.subr.bf16.mxu0 %v714
    %859 = vmatpush2.bf16.msra.mxu0 %v713
    %860 = vmatprep.subr.bf16.mxu0 %v711
    %861 = vmatpush2.bf16.msra.mxu0 %v710
    %862 = vmatprep.mubr.bf16.mxu0 %v328
    %863 = vmatmul.mubr.bf16.gmra.mxu0 %v327
    %v864 = vpop.f32.mrf.mxu0
    %v865 = vadd.f32 %v434, %v864
    %v866 = vpop.f32.mrf.mxu0
    %v867 = vadd.f32 %v438, %v866
    %v868 = vpop.f32.mrf.mxu0
    %v869 = vpop.f32.mrf.mxu0
    %870 = vdwg.mxu0
    %871 = vmatprep.subr.bf16.mxu0 %v756
    %872 = vmatpush1.bf16.msra.mxu0 %v755
    %873 = vmatprep.subr.bf16.mxu0 %v753
    %874 = vmatpush1.bf16.msra.mxu0 %v752
    %875 = vmatprep.subr.bf16.mxu0 %v750
    %876 = vmatpush1.bf16.msra.mxu0 %v749
    %877 = vmatprep.subr.bf16.mxu0 %v747
    %878 = vmatpush1.bf16.msra.mxu0 %v746
    %879 = vmatprep.subr.bf16.mxu0 %v744
    %880 = vmatpush1.bf16.msra.mxu0 %v743
    %881 = vmatprep.subr.bf16.mxu0 %v741
    %882 = vmatpush1.bf16.msra.mxu0 %v740
    %883 = vmatprep.subr.bf16.mxu0 %v738
    %884 = vmatpush1.bf16.msra.mxu0 %v737
    %885 = vmatprep.subr.bf16.mxu0 %v735
    %886 = vmatpush1.bf16.msra.mxu0 %v734
    %887 = vmatprep.subr.bf16.mxu0 0
    %888 = vmatpush2.bf16.msra.mxu0 0
    %889 = vmatprep.subr.bf16.mxu0 0
    %890 = vmatpush2.bf16.msra.mxu0 0
    %891 = vmatprep.subr.bf16.mxu0 0
    %892 = vmatpush2.bf16.msra.mxu0 0
    %893 = vmatprep.subr.bf16.mxu0 0
    %894 = vmatpush2.bf16.msra.mxu0 0
    %895 = vmatprep.subr.bf16.mxu0 0
    %896 = vmatpush2.bf16.msra.mxu0 0
    %897 = vmatprep.subr.bf16.mxu0 0
    %898 = vmatpush2.bf16.msra.mxu0 0
    %899 = vmatprep.subr.bf16.mxu0 0
    %900 = vmatpush2.bf16.msra.mxu0 0
    %901 = vmatprep.subr.bf16.mxu0 0
    %902 = vmatpush2.bf16.msra.mxu0 0
    %903 = vmatprep.mubr.bf16.mxu0 0
    %904 = vmatmul.mubr.bf16.gmra.mxu0 %v329
    %v905 = vpop.f32.mrf.mxu0
    %v906 = vadd.f32 %v865, %v905
    %v907 = vpop.f32.mrf.mxu0
    %v908 = vadd.f32 %v867, %v907
    %v909 = vpop.f32.mrf.mxu0
    %v910 = vpop.f32.mrf.mxu0
    %911 = vdwg.mxu0
    %912 = vmatprep.subr.bf16.mxu0 0
    %913 = vmatpush1.bf16.msra.mxu0 %v709
    %914 = vmatprep.subr.bf16.mxu0 0
    %915 = vmatpush1.bf16.msra.mxu0 %v706
    %916 = vmatprep.subr.bf16.mxu0 0
    %917 = vmatpush1.bf16.msra.mxu0 %v703
    %918 = vmatprep.subr.bf16.mxu0 0
    %919 = vmatpush1.bf16.msra.mxu0 %v700
    %920 = vmatprep.subr.bf16.mxu0 0
    %921 = vmatpush1.bf16.msra.mxu0 %v697
    %922 = vmatprep.subr.bf16.mxu0 0
    %923 = vmatpush1.bf16.msra.mxu0 %v694
    %924 = vmatprep.subr.bf16.mxu0 0
    %925 = vmatpush1.bf16.msra.mxu0 %v691
    %926 = vmatprep.subr.bf16.mxu0 0
    %927 = vmatpush1.bf16.msra.mxu0 %v688
    %928 = vmatprep.subr.bf16.mxu0 0
    %929 = vmatpush2.bf16.msra.mxu0 %v733
    %930 = vmatprep.subr.bf16.mxu0 0
    %931 = vmatpush2.bf16.msra.mxu0 %v730
    %932 = vmatprep.subr.bf16.mxu0 0
    %933 = vmatpush2.bf16.msra.mxu0 %v727
    %934 = vmatprep.subr.bf16.mxu0 0
    %935 = vmatpush2.bf16.msra.mxu0 %v724
    %936 = vmatprep.subr.bf16.mxu0 0
    %937 = vmatpush2.bf16.msra.mxu0 %v721
    %938 = vmatprep.subr.bf16.mxu0 0
    %939 = vmatpush2.bf16.msra.mxu0 %v718
    %940 = vmatprep.subr.bf16.mxu0 0
    %941 = vmatpush2.bf16.msra.mxu0 %v715
    %942 = vmatprep.subr.bf16.mxu0 0
    %943 = vmatpush2.bf16.msra.mxu0 %v712
    %944 = vmatprep.mubr.bf16.mxu0 %v328
    %945 = vmatmul.mubr.bf16.gmra.mxu0 %v327
    %v946 = vpop.f32.mrf.mxu0
    %v947 = vadd.f32 %v442, %v946
    %v948 = vpop.f32.mrf.mxu0
    %v949 = vpop.f32.mrf.mxu0
    %v950 = vpop.f32.mrf.mxu0
    %951 = vdwg.mxu0
    %952 = vmatprep.subr.bf16.mxu0 0
    %953 = vmatpush1.bf16.msra.mxu0 %v757
    %954 = vmatprep.subr.bf16.mxu0 0
    %955 = vmatpush1.bf16.msra.mxu0 %v754
    %956 = vmatprep.subr.bf16.mxu0 0
    %957 = vmatpush1.bf16.msra.mxu0 %v751
    %958 = vmatprep.subr.bf16.mxu0 0
    %959 = vmatpush1.bf16.msra.mxu0 %v748
    %960 = vmatprep.subr.bf16.mxu0 0
    %961 = vmatpush1.bf16.msra.mxu0 %v745
    %962 = vmatprep.subr.bf16.mxu0 0
    %963 = vmatpush1.bf16.msra.mxu0 %v742
    %964 = vmatprep.subr.bf16.mxu0 0
    %965 = vmatpush1.bf16.msra.mxu0 %v739
    %966 = vmatprep.subr.bf16.mxu0 0
    %967 = vmatpush1.bf16.msra.mxu0 %v736
    %968 = vmatprep.subr.bf16.mxu0 0
    %969 = vmatpush2.bf16.msra.mxu0 0
    %970 = vmatprep.subr.bf16.mxu0 0
    %971 = vmatpush2.bf16.msra.mxu0 0
    %972 = vmatprep.subr.bf16.mxu0 0
    %973 = vmatpush2.bf16.msra.mxu0 0
    %974 = vmatprep.subr.bf16.mxu0 0
    %975 = vmatpush2.bf16.msra.mxu0 0
    %976 = vmatprep.subr.bf16.mxu0 0
    %977 = vmatpush2.bf16.msra.mxu0 0
    %978 = vmatprep.subr.bf16.mxu0 0
    %979 = vmatpush2.bf16.msra.mxu0 0
    %980 = vmatprep.subr.bf16.mxu0 0
    %981 = vmatpush2.bf16.msra.mxu0 0
    %982 = vmatprep.subr.bf16.mxu0 0
    %983 = vmatpush2.bf16.msra.mxu0 0
    %984 = vmatprep.mubr.bf16.mxu0 0
    %985 = vmatmul.mubr.bf16.gmra.mxu0 %v329
    %v986 = vpop.f32.mrf.mxu0
    %v987 = vadd.f32 %v947, %v986
    %v988 = vpop.f32.mrf.mxu0
    %v989 = vpop.f32.mrf.mxu0
    %v990 = vpop.f32.mrf.mxu0
    %991 = vdwg.mxu0
    %v992 = vmax.f32 %v906, 0.0
    %v993 = vmax.f32 %v908, 0.0
    %v994 = vmax.f32 %v987, 0.0
    %v995 = vpack.c.bf16 %v992, %v992
    %v996 = vpack.c.bf16 %v993, %v993
    %v997 = vpack.c.bf16 %v994, %v994
    %v998 = vld [vmem:[#allocation6] sm:$0xff]
    %v999 = vld [vmem:[#allocation6 + $0x8] sm:$0xf]
    %v1000 = vld [vmem:[#allocation6 + $0xc] sm:$0xff]
    %v1001 = vld [vmem:[#allocation6 + $0x14] sm:$0xf]
    %v1002 = vld [vmem:[#allocation6 + $0x18] sm:$0xff]
    %v1003 = vld [vmem:[#allocation6 + $0x20] sm:$0xf]
    %v1004 = vld [vmem:[#allocation6 + $0x24] sm:$0xff]
    %v1005 = vld [vmem:[#allocation6 + $0x2c] sm:$0xf]
    %v1006 = vld [vmem:[#allocation6 + $0x30] sm:$0xff]
    %v1007 = vld [vmem:[#allocation6 + $0x38] sm:$0xf]
    %v1008 = vld [vmem:[#allocation6 + $0x3c] sm:$0xff]
    %v1009 = vld [vmem:[#allocation6 + $0x44] sm:$0xf]
    %v1010 = vld [vmem:[#allocation6 + $0x48] sm:$0xff]
    %v1011 = vld [vmem:[#allocation6 + $0x50] sm:$0xf]
    %v1012 = vld [vmem:[#allocation6 + $0x54] sm:$0xff]
    %v1013 = vld [vmem:[#allocation6 + $0x5c] sm:$0xf]
    %v1014 = vld [vmem:[#allocation6 + $0x60] sm:$0xff]
    %v1015 = vld [vmem:[#allocation6 + $0x68] sm:$0xf]
    %v1016 = vld [vmem:[#allocation6 + $0x6c] sm:$0xff]
    %v1017 = vld [vmem:[#allocation6 + $0x74] sm:$0xf]
    %v1018 = vld [vmem:[#allocation6 + $0x78] sm:$0xff]
    %v1019 = vld [vmem:[#allocation6 + $0x80] sm:$0xf]
    %v1020 = vld [vmem:[#allocation6 + $0x84] sm:$0xff]
    %v1021 = vld [vmem:[#allocation6 + $0x8c] sm:$0xf]
    %v1022 = vld [vmem:[#allocation6 + $0x90] sm:$0xff]
    %v1023 = vld [vmem:[#allocation6 + $0x98] sm:$0xf]
    %v1024 = vld [vmem:[#allocation6 + $0x9c] sm:$0xff]
    %v1025 = vld [vmem:[#allocation6 + $0xa4] sm:$0xf]
    %v1026 = vld [vmem:[#allocation6 + $0xa8] sm:$0xff]
    %v1027 = vld [vmem:[#allocation6 + $0xb0] sm:$0xf]
    %v1028 = vld [vmem:[#allocation6 + $0xb4] sm:$0xff]
    %v1029 = vld [vmem:[#allocation6 + $0xbc] sm:$0xf]
    %v1030 = vld [vmem:[#allocation6 + $0xc0] sm:$0xff]
    %v1031 = vld [vmem:[#allocation6 + $0xc8] sm:$0xf]
    %v1032 = vld [vmem:[#allocation6 + $0xcc] sm:$0xff]
    %v1033 = vld [vmem:[#allocation6 + $0xd4] sm:$0xf]
    %v1034 = vld [vmem:[#allocation6 + $0xd8] sm:$0xff]
    %v1035 = vld [vmem:[#allocation6 + $0xe0] sm:$0xf]
    %v1036 = vld [vmem:[#allocation6 + $0xe4] sm:$0xff]
    %v1037 = vld [vmem:[#allocation6 + $0xec] sm:$0xf]
    %v1038 = vld [vmem:[#allocation6 + $0xf0] sm:$0xff]
    %v1039 = vld [vmem:[#allocation6 + $0xf8] sm:$0xf]
    %v1040 = vld [vmem:[#allocation6 + $0xfc] sm:$0xff]
    %v1041 = vld [vmem:[#allocation6 + $0x104] sm:$0xf]
    %v1042 = vld [vmem:[#allocation6 + $0x108] sm:$0xff]
    %v1043 = vld [vmem:[#allocation6 + $0x110] sm:$0xf]
    %v1044 = vld [vmem:[#allocation6 + $0x114] sm:$0xff]
    %v1045 = vld [vmem:[#allocation6 + $0x11c] sm:$0xf]
    %v1046 = vld [vmem:[#allocation6 + $0x120] sm:$0xff]
    %v1047 = vld [vmem:[#allocation6 + $0x128] sm:$0xf]
    %v1048 = vld [vmem:[#allocation6 + $0x12c] sm:$0xff]
    %v1049 = vld [vmem:[#allocation6 + $0x134] sm:$0xf]
    %v1050 = vld [vmem:[#allocation6 + $0x138] sm:$0xff]
    %v1051 = vld [vmem:[#allocation6 + $0x140] sm:$0xf]
    %v1052 = vld [vmem:[#allocation6 + $0x144] sm:$0xff]
    %v1053 = vld [vmem:[#allocation6 + $0x14c] sm:$0xf]
    %v1054 = vld [vmem:[#allocation6 + $0x150] sm:$0xff]
    %v1055 = vld [vmem:[#allocation6 + $0x158] sm:$0xf]
    %v1056 = vld [vmem:[#allocation6 + $0x15c] sm:$0xff]
    %v1057 = vld [vmem:[#allocation6 + $0x164] sm:$0xf]
    %v1058 = vld [vmem:[#allocation6 + $0x168] sm:$0xff]
    %v1059 = vld [vmem:[#allocation6 + $0x170] sm:$0xf]
    %v1060 = vld [vmem:[#allocation6 + $0x174] sm:$0xff]
    %v1061 = vld [vmem:[#allocation6 + $0x17c] sm:$0xf]
    %v1062 = vld [vmem:[#allocation6 + $0x180] sm:$0xff]
    %v1063 = vld [vmem:[#allocation6 + $0x188] sm:$0xf]
    %v1064 = vld [vmem:[#allocation6 + $0x18c] sm:$0xff]
    %v1065 = vld [vmem:[#allocation6 + $0x194] sm:$0xf]
    %v1066 = vld [vmem:[#allocation6 + $0x198] sm:$0xff]
    %v1067 = vld [vmem:[#allocation6 + $0x1a0] sm:$0xf]
    %v1068 = vld [vmem:[#allocation6 + $0x1a4] sm:$0xff]
    %v1069 = vld [vmem:[#allocation6 + $0x1ac] sm:$0xf]
    %v1070 = vld [vmem:[#allocation6 + $0x1b0] sm:$0xff]
    %v1071 = vld [vmem:[#allocation6 + $0x1b8] sm:$0xf]
    %v1072 = vld [vmem:[#allocation6 + $0x1bc] sm:$0xff]
    %v1073 = vld [vmem:[#allocation6 + $0x1c4] sm:$0xf]
    %v1074 = vld [vmem:[#allocation6 + $0x1c8] sm:$0xff]
    %v1075 = vld [vmem:[#allocation6 + $0x1d0] sm:$0xf]
    %v1076 = vld [vmem:[#allocation6 + $0x1d4] sm:$0xff]
    %v1077 = vld [vmem:[#allocation6 + $0x1dc] sm:$0xf]
    %v1078 = vld [vmem:[#allocation6 + $0x1e0] sm:$0xff]
    %v1079 = vld [vmem:[#allocation6 + $0x1e8] sm:$0xf]
    %v1080 = vld [vmem:[#allocation6 + $0x1ec] sm:$0xff]
    %v1081 = vld [vmem:[#allocation6 + $0x1f4] sm:$0xf]
    %v1082 = vld [vmem:[#allocation6 + $0x1f8] sm:$0xff]
    %v1083 = vld [vmem:[#allocation6 + $0x200] sm:$0xf]
    %v1084 = vld [vmem:[#allocation6 + $0x204] sm:$0xff]
    %v1085 = vld [vmem:[#allocation6 + $0x20c] sm:$0xf]
    %v1086 = vld [vmem:[#allocation6 + $0x210] sm:$0xff]
    %v1087 = vld [vmem:[#allocation6 + $0x218] sm:$0xf]
    %v1088 = vld [vmem:[#allocation6 + $0x21c] sm:$0xff]
    %v1089 = vld [vmem:[#allocation6 + $0x224] sm:$0xf]
    %v1090 = vld [vmem:[#allocation6 + $0x228] sm:$0xff]
    %v1091 = vld [vmem:[#allocation6 + $0x230] sm:$0xf]
    %v1092 = vld [vmem:[#allocation6 + $0x234] sm:$0xff]
    %v1093 = vld [vmem:[#allocation6 + $0x23c] sm:$0xf]
    %v1094 = vld [vmem:[%s6] sm:$0x7]
    %v1096 = vlaneseq
    %v1097 = vshrl.u32 %v1096, 7
    %v1098 = vsub.s32 0, %v1097
    %v1099 = vrot.slane %v1094, %v1098
    %v1100 = vlaneseq
    %v1101 = vshrl.u32 %v1100, 7
    %v1102 = vsub.s32 1, %v1101
    %v1103 = vrot.slane %v1094, %v1102
    %v1104 = vlaneseq
    %v1105 = vshrl.u32 %v1104, 7
    %v1106 = vsub.s32 2, %v1105
    %v1107 = vrot.slane %v1094, %v1106
    %v1207 = vunpack.c.l.b16 %v998
    %v1208 = vunpack.c.h.b16 %v998
    %v1209 = vunpack.c.l.b16 %v999
    %v1210 = vunpack.c.l.b16 %v1000
    %v1211 = vunpack.c.h.b16 %v1000
    %v1212 = vunpack.c.l.b16 %v1001
    %v1213 = vunpack.c.l.b16 %v1002
    %v1214 = vunpack.c.h.b16 %v1002
    %v1215 = vunpack.c.l.b16 %v1003
    %v1216 = vunpack.c.l.b16 %v1004
    %v1217 = vunpack.c.h.b16 %v1004
    %v1218 = vunpack.c.l.b16 %v1005
    %v1219 = vunpack.c.l.b16 %v1006
    %v1220 = vunpack.c.h.b16 %v1006
    %v1221 = vunpack.c.l.b16 %v1007
    %v1222 = vunpack.c.l.b16 %v1008
    %v1223 = vunpack.c.h.b16 %v1008
    %v1224 = vunpack.c.l.b16 %v1009
    %v1225 = vunpack.c.l.b16 %v1010
    %v1226 = vunpack.c.h.b16 %v1010
    %v1227 = vunpack.c.l.b16 %v1011
    %v1228 = vunpack.c.l.b16 %v1012
    %v1229 = vunpack.c.h.b16 %v1012
    %v1230 = vunpack.c.l.b16 %v1013
    %v1231 = vunpack.c.l.b16 %v1014
    %v1232 = vunpack.c.h.b16 %v1014
    %v1233 = vunpack.c.l.b16 %v1015
    %v1234 = vunpack.c.l.b16 %v1016
    %v1235 = vunpack.c.h.b16 %v1016
    %v1236 = vunpack.c.l.b16 %v1017
    %v1237 = vunpack.c.l.b16 %v1018
    %v1238 = vunpack.c.h.b16 %v1018
    %v1239 = vunpack.c.l.b16 %v1019
    %v1240 = vunpack.c.l.b16 %v1020
    %v1241 = vunpack.c.h.b16 %v1020
    %v1242 = vunpack.c.l.b16 %v1021
    %v1243 = vunpack.c.l.b16 %v1022
    %v1244 = vunpack.c.h.b16 %v1022
    %v1245 = vunpack.c.l.b16 %v1023
    %v1246 = vunpack.c.l.b16 %v1024
    %v1247 = vunpack.c.h.b16 %v1024
    %v1248 = vunpack.c.l.b16 %v1025
    %v1249 = vunpack.c.l.b16 %v1026
    %v1250 = vunpack.c.h.b16 %v1026
    %v1251 = vunpack.c.l.b16 %v1027
    %v1252 = vunpack.c.l.b16 %v1028
    %v1253 = vunpack.c.h.b16 %v1028
    %v1254 = vunpack.c.l.b16 %v1029
    %v1255 = vunpack.c.l.b16 %v1030
    %v1256 = vunpack.c.h.b16 %v1030
    %v1257 = vunpack.c.l.b16 %v1031
    %v1258 = vunpack.c.l.b16 %v1032
    %v1259 = vunpack.c.h.b16 %v1032
    %v1260 = vunpack.c.l.b16 %v1033
    %v1261 = vunpack.c.l.b16 %v1034
    %v1262 = vunpack.c.h.b16 %v1034
    %v1263 = vunpack.c.l.b16 %v1035
    %v1264 = vunpack.c.l.b16 %v1036
    %v1265 = vunpack.c.h.b16 %v1036
    %v1266 = vunpack.c.l.b16 %v1037
    %v1267 = vunpack.c.l.b16 %v1038
    %v1268 = vunpack.c.h.b16 %v1038
    %v1269 = vunpack.c.l.b16 %v1039
    %v1270 = vunpack.c.l.b16 %v1040
    %v1271 = vunpack.c.h.b16 %v1040
    %v1272 = vunpack.c.l.b16 %v1041
    %v1273 = vunpack.c.l.b16 %v1042
    %v1274 = vunpack.c.h.b16 %v1042
    %v1275 = vunpack.c.l.b16 %v1043
    %v1276 = vunpack.c.l.b16 %v1044
    %v1277 = vunpack.c.h.b16 %v1044
    %v1278 = vunpack.c.l.b16 %v1045
    %v1279 = vunpack.c.l.b16 %v1046
    %v1280 = vunpack.c.h.b16 %v1046
    %v1281 = vunpack.c.l.b16 %v1047
    %v1282 = vunpack.c.l.b16 %v1048
    %v1283 = vunpack.c.h.b16 %v1048
    %v1284 = vunpack.c.l.b16 %v1049
    %v1285 = vunpack.c.l.b16 %v1050
    %v1286 = vunpack.c.h.b16 %v1050
    %v1287 = vunpack.c.l.b16 %v1051
    %v1288 = vunpack.c.l.b16 %v1052
    %v1289 = vunpack.c.h.b16 %v1052
    %v1290 = vunpack.c.l.b16 %v1053
    %v1291 = vunpack.c.l.b16 %v1054
    %v1292 = vunpack.c.h.b16 %v1054
    %v1293 = vunpack.c.l.b16 %v1055
    %v1294 = vunpack.c.l.b16 %v1056
    %v1295 = vunpack.c.h.b16 %v1056
    %v1296 = vunpack.c.l.b16 %v1057
    %v1297 = vunpack.c.l.b16 %v1058
    %v1298 = vunpack.c.h.b16 %v1058
    %v1299 = vunpack.c.l.b16 %v1059
    %v1300 = vunpack.c.l.b16 %v1060
    %v1301 = vunpack.c.h.b16 %v1060
    %v1302 = vunpack.c.l.b16 %v1061
    %v1303 = vunpack.c.l.b16 %v1062
    %v1304 = vunpack.c.h.b16 %v1062
    %v1305 = vunpack.c.l.b16 %v1063
    %v1306 = vunpack.c.l.b16 %v1064
    %v1307 = vunpack.c.h.b16 %v1064
    %v1308 = vunpack.c.l.b16 %v1065
    %v1309 = vunpack.c.l.b16 %v1066
    %v1310 = vunpack.c.h.b16 %v1066
    %v1311 = vunpack.c.l.b16 %v1067
    %v1312 = vunpack.c.l.b16 %v1068
    %v1313 = vunpack.c.h.b16 %v1068
    %v1314 = vunpack.c.l.b16 %v1069
    %v1315 = vunpack.c.l.b16 %v1070
    %v1316 = vunpack.c.h.b16 %v1070
    %v1317 = vunpack.c.l.b16 %v1071
    %v1318 = vunpack.c.l.b16 %v1072
    %v1319 = vunpack.c.h.b16 %v1072
    %v1320 = vunpack.c.l.b16 %v1073
    %v1321 = vunpack.c.l.b16 %v1074
    %v1322 = vunpack.c.h.b16 %v1074
    %v1323 = vunpack.c.l.b16 %v1075
    %v1324 = vunpack.c.l.b16 %v1076
    %v1325 = vunpack.c.h.b16 %v1076
    %v1326 = vunpack.c.l.b16 %v1077
    %v1327 = vunpack.c.l.b16 %v1078
    %v1328 = vunpack.c.h.b16 %v1078
    %v1329 = vunpack.c.l.b16 %v1079
    %v1330 = vunpack.c.l.b16 %v1080
    %v1331 = vunpack.c.h.b16 %v1080
    %v1332 = vunpack.c.l.b16 %v1081
    %v1333 = vunpack.c.l.b16 %v1082
    %v1334 = vunpack.c.h.b16 %v1082
    %v1335 = vunpack.c.l.b16 %v1083
    %v1336 = vunpack.c.l.b16 %v1084
    %v1337 = vunpack.c.h.b16 %v1084
    %v1338 = vunpack.c.l.b16 %v1085
    %v1339 = vunpack.c.l.b16 %v1086
    %v1340 = vunpack.c.h.b16 %v1086
    %v1341 = vunpack.c.l.b16 %v1087
    %v1342 = vunpack.c.l.b16 %v1088
    %v1343 = vunpack.c.h.b16 %v1088
    %v1344 = vunpack.c.l.b16 %v1089
    %v1345 = vunpack.c.l.b16 %v1090
    %v1346 = vunpack.c.h.b16 %v1090
    %v1347 = vunpack.c.l.b16 %v1091
    %v1348 = vunpack.c.l.b16 %v1092
    %v1349 = vunpack.c.h.b16 %v1092
    %v1350 = vunpack.c.l.b16 %v1093
    %v1351 = vpack.c.b16 %v1210, %v1207
    %v1352 = vpack.c.b16 %v1211, %v1208
    %v1353 = vpack.c.b16 %v1212, %v1209
    %v1354 = vpack.c.b16 %v1216, %v1213
    %v1355 = vpack.c.b16 %v1217, %v1214
    %v1356 = vpack.c.b16 %v1218, %v1215
    %v1357 = vpack.c.b16 %v1222, %v1219
    %v1358 = vpack.c.b16 %v1223, %v1220
    %v1359 = vpack.c.b16 %v1224, %v1221
    %v1360 = vpack.c.b16 %v1228, %v1225
    %v1361 = vpack.c.b16 %v1229, %v1226
    %v1362 = vpack.c.b16 %v1230, %v1227
    %v1363 = vpack.c.b16 %v1234, %v1231
    %v1364 = vpack.c.b16 %v1235, %v1232
    %v1365 = vpack.c.b16 %v1236, %v1233
    %v1366 = vpack.c.b16 %v1240, %v1237
    %v1367 = vpack.c.b16 %v1241, %v1238
    %v1368 = vpack.c.b16 %v1242, %v1239
    %v1369 = vpack.c.b16 %v1246, %v1243
    %v1370 = vpack.c.b16 %v1247, %v1244
    %v1371 = vpack.c.b16 %v1248, %v1245
    %v1372 = vpack.c.b16 %v1252, %v1249
    %v1373 = vpack.c.b16 %v1253, %v1250
    %v1374 = vpack.c.b16 %v1254, %v1251
    %v1375 = vpack.c.b16 %v1258, %v1255
    %v1376 = vpack.c.b16 %v1259, %v1256
    %v1377 = vpack.c.b16 %v1260, %v1257
    %v1378 = vpack.c.b16 %v1264, %v1261
    %v1379 = vpack.c.b16 %v1265, %v1262
    %v1380 = vpack.c.b16 %v1266, %v1263
    %v1381 = vpack.c.b16 %v1270, %v1267
    %v1382 = vpack.c.b16 %v1271, %v1268
    %v1383 = vpack.c.b16 %v1272, %v1269
    %v1384 = vpack.c.b16 %v1276, %v1273
    %v1385 = vpack.c.b16 %v1277, %v1274
    %v1386 = vpack.c.b16 %v1278, %v1275
    %v1387 = vpack.c.b16 %v1282, %v1279
    %v1388 = vpack.c.b16 %v1283, %v1280
    %v1389 = vpack.c.b16 %v1284, %v1281
    %v1390 = vpack.c.b16 %v1288, %v1285
    %v1391 = vpack.c.b16 %v1289, %v1286
    %v1392 = vpack.c.b16 %v1290, %v1287
    %v1393 = vpack.c.b16 %v1294, %v1291
    %v1394 = vpack.c.b16 %v1295, %v1292
    %v1395 = vpack.c.b16 %v1296, %v1293
    %v1396 = vpack.c.b16 %v1300, %v1297
    %v1397 = vpack.c.b16 %v1301, %v1298
    %v1398 = vpack.c.b16 %v1302, %v1299
    %v1399 = vpack.c.b16 %v1306, %v1303
    %v1400 = vpack.c.b16 %v1307, %v1304
    %v1401 = vpack.c.b16 %v1308, %v1305
    %v1402 = vpack.c.b16 %v1312, %v1309
    %v1403 = vpack.c.b16 %v1313, %v1310
    %v1404 = vpack.c.b16 %v1314, %v1311
    %v1405 = vpack.c.b16 %v1318, %v1315
    %v1406 = vpack.c.b16 %v1319, %v1316
    %v1407 = vpack.c.b16 %v1320, %v1317
    %v1408 = vpack.c.b16 %v1324, %v1321
    %v1409 = vpack.c.b16 %v1325, %v1322
    %v1410 = vpack.c.b16 %v1326, %v1323
    %v1411 = vpack.c.b16 %v1330, %v1327
    %v1412 = vpack.c.b16 %v1331, %v1328
    %v1413 = vpack.c.b16 %v1332, %v1329
    %v1414 = vpack.c.b16 %v1336, %v1333
    %v1415 = vpack.c.b16 %v1337, %v1334
    %v1416 = vpack.c.b16 %v1338, %v1335
    %v1417 = vpack.c.b16 %v1342, %v1339
    %v1418 = vpack.c.b16 %v1343, %v1340
    %v1419 = vpack.c.b16 %v1344, %v1341
    %v1420 = vpack.c.b16 %v1348, %v1345
    %v1421 = vpack.c.b16 %v1349, %v1346
    %v1422 = vpack.c.b16 %v1350, %v1347
    %1495 = vmatprep.subr.bf16.mxu0 %v1373
    %1496 = vmatpush1.bf16.msra.mxu0 %v1372
    %1497 = vmatprep.subr.bf16.mxu0 %v1370
    %1498 = vmatpush1.bf16.msra.mxu0 %v1369
    %1499 = vmatprep.subr.bf16.mxu0 %v1367
    %1500 = vmatpush1.bf16.msra.mxu0 %v1366
    %1501 = vmatprep.subr.bf16.mxu0 %v1364
    %1502 = vmatpush1.bf16.msra.mxu0 %v1363
    %1503 = vmatprep.subr.bf16.mxu0 %v1361
    %1504 = vmatpush1.bf16.msra.mxu0 %v1360
    %1505 = vmatprep.subr.bf16.mxu0 %v1358
    %1506 = vmatpush1.bf16.msra.mxu0 %v1357
    %1507 = vmatprep.subr.bf16.mxu0 %v1355
    %1508 = vmatpush1.bf16.msra.mxu0 %v1354
    %1509 = vmatprep.subr.bf16.mxu0 %v1352
    %1510 = vmatpush1.bf16.msra.mxu0 %v1351
    %1511 = vmatprep.subr.bf16.mxu0 %v1397
    %1512 = vmatpush2.bf16.msra.mxu0 %v1396
    %1513 = vmatprep.subr.bf16.mxu0 %v1394
    %1514 = vmatpush2.bf16.msra.mxu0 %v1393
    %1515 = vmatprep.subr.bf16.mxu0 %v1391
    %1516 = vmatpush2.bf16.msra.mxu0 %v1390
    %1517 = vmatprep.subr.bf16.mxu0 %v1388
    %1518 = vmatpush2.bf16.msra.mxu0 %v1387
    %1519 = vmatprep.subr.bf16.mxu0 %v1385
    %1520 = vmatpush2.bf16.msra.mxu0 %v1384
    %1521 = vmatprep.subr.bf16.mxu0 %v1382
    %1522 = vmatpush2.bf16.msra.mxu0 %v1381
    %1523 = vmatprep.subr.bf16.mxu0 %v1379
    %1524 = vmatpush2.bf16.msra.mxu0 %v1378
    %1525 = vmatprep.subr.bf16.mxu0 %v1376
    %1526 = vmatpush2.bf16.msra.mxu0 %v1375
    %1527 = vmatprep.mubr.bf16.mxu0 %v331
    %1528 = vmatmul.mubr.bf16.gmra.mxu0 %v330
    %v1529 = vpop.f32.mrf.mxu0
    %v1530 = vadd.f32 %v1099, %v1529
    %v1531 = vpop.f32.mrf.mxu0
    %v1532 = vadd.f32 %v1103, %v1531
    %v1533 = vpop.f32.mrf.mxu0
    %v1534 = vpop.f32.mrf.mxu0
    %1535 = vdwg.mxu0
    %1536 = vmatprep.subr.bf16.mxu0 %v1421
    %1537 = vmatpush1.bf16.msra.mxu0 %v1420
    %1538 = vmatprep.subr.bf16.mxu0 %v1418
    %1539 = vmatpush1.bf16.msra.mxu0 %v1417
    %1540 = vmatprep.subr.bf16.mxu0 %v1415
    %1541 = vmatpush1.bf16.msra.mxu0 %v1414
    %1542 = vmatprep.subr.bf16.mxu0 %v1412
    %1543 = vmatpush1.bf16.msra.mxu0 %v1411
    %1544 = vmatprep.subr.bf16.mxu0 %v1409
    %1545 = vmatpush1.bf16.msra.mxu0 %v1408
    %1546 = vmatprep.subr.bf16.mxu0 %v1406
    %1547 = vmatpush1.bf16.msra.mxu0 %v1405
    %1548 = vmatprep.subr.bf16.mxu0 %v1403
    %1549 = vmatpush1.bf16.msra.mxu0 %v1402
    %1550 = vmatprep.subr.bf16.mxu0 %v1400
    %1551 = vmatpush1.bf16.msra.mxu0 %v1399
    %1552 = vmatprep.subr.bf16.mxu0 0
    %1553 = vmatpush2.bf16.msra.mxu0 0
    %1554 = vmatprep.subr.bf16.mxu0 0
    %1555 = vmatpush2.bf16.msra.mxu0 0
    %1556 = vmatprep.subr.bf16.mxu0 0
    %1557 = vmatpush2.bf16.msra.mxu0 0
    %1558 = vmatprep.subr.bf16.mxu0 0
    %1559 = vmatpush2.bf16.msra.mxu0 0
    %1560 = vmatprep.subr.bf16.mxu0 0
    %1561 = vmatpush2.bf16.msra.mxu0 0
    %1562 = vmatprep.subr.bf16.mxu0 0
    %1563 = vmatpush2.bf16.msra.mxu0 0
    %1564 = vmatprep.subr.bf16.mxu0 0
    %1565 = vmatpush2.bf16.msra.mxu0 0
    %1566 = vmatprep.subr.bf16.mxu0 0
    %1567 = vmatpush2.bf16.msra.mxu0 0
    %1568 = vmatprep.mubr.bf16.mxu0 0
    %1569 = vmatmul.mubr.bf16.gmra.mxu0 %v332
    %v1570 = vpop.f32.mrf.mxu0
    %v1571 = vadd.f32 %v1530, %v1570
    %v1572 = vpop.f32.mrf.mxu0
    %v1573 = vadd.f32 %v1532, %v1572
    %v1574 = vpop.f32.mrf.mxu0
    %v1575 = vpop.f32.mrf.mxu0
    %1576 = vdwg.mxu0
    %1577 = vmatprep.subr.bf16.mxu0 0
    %1578 = vmatpush1.bf16.msra.mxu0 %v1374
    %1579 = vmatprep.subr.bf16.mxu0 0
    %1580 = vmatpush1.bf16.msra.mxu0 %v1371
    %1581 = vmatprep.subr.bf16.mxu0 0
    %1582 = vmatpush1.bf16.msra.mxu0 %v1368
    %1583 = vmatprep.subr.bf16.mxu0 0
    %1584 = vmatpush1.bf16.msra.mxu0 %v1365
    %1585 = vmatprep.subr.bf16.mxu0 0
    %1586 = vmatpush1.bf16.msra.mxu0 %v1362
    %1587 = vmatprep.subr.bf16.mxu0 0
    %1588 = vmatpush1.bf16.msra.mxu0 %v1359
    %1589 = vmatprep.subr.bf16.mxu0 0
    %1590 = vmatpush1.bf16.msra.mxu0 %v1356
    %1591 = vmatprep.subr.bf16.mxu0 0
    %1592 = vmatpush1.bf16.msra.mxu0 %v1353
    %1593 = vmatprep.subr.bf16.mxu0 0
    %1594 = vmatpush2.bf16.msra.mxu0 %v1398
    %1595 = vmatprep.subr.bf16.mxu0 0
    %1596 = vmatpush2.bf16.msra.mxu0 %v1395
    %1597 = vmatprep.subr.bf16.mxu0 0
    %1598 = vmatpush2.bf16.msra.mxu0 %v1392
    %1599 = vmatprep.subr.bf16.mxu0 0
    %1600 = vmatpush2.bf16.msra.mxu0 %v1389
    %1601 = vmatprep.subr.bf16.mxu0 0
    %1602 = vmatpush2.bf16.msra.mxu0 %v1386
    %1603 = vmatprep.subr.bf16.mxu0 0
    %1604 = vmatpush2.bf16.msra.mxu0 %v1383
    %1605 = vmatprep.subr.bf16.mxu0 0
    %1606 = vmatpush2.bf16.msra.mxu0 %v1380
    %1607 = vmatprep.subr.bf16.mxu0 0
    %1608 = vmatpush2.bf16.msra.mxu0 %v1377
    %1609 = vmatprep.mubr.bf16.mxu0 %v331
    %1610 = vmatmul.mubr.bf16.gmra.mxu0 %v330
    %v1611 = vpop.f32.mrf.mxu0
    %v1612 = vadd.f32 %v1107, %v1611
    %v1613 = vpop.f32.mrf.mxu0
    %v1614 = vpop.f32.mrf.mxu0
    %v1615 = vpop.f32.mrf.mxu0
    %1616 = vdwg.mxu0
    %1617 = vmatprep.subr.bf16.mxu0 0
    %1618 = vmatpush1.bf16.msra.mxu0 %v1422
    %1619 = vmatprep.subr.bf16.mxu0 0
    %1620 = vmatpush1.bf16.msra.mxu0 %v1419
    %1621 = vmatprep.subr.bf16.mxu0 0
    %1622 = vmatpush1.bf16.msra.mxu0 %v1416
    %1623 = vmatprep.subr.bf16.mxu0 0
    %1624 = vmatpush1.bf16.msra.mxu0 %v1413
    %1625 = vmatprep.subr.bf16.mxu0 0
    %1626 = vmatpush1.bf16.msra.mxu0 %v1410
    %1627 = vmatprep.subr.bf16.mxu0 0
    %1628 = vmatpush1.bf16.msra.mxu0 %v1407
    %1629 = vmatprep.subr.bf16.mxu0 0
    %1630 = vmatpush1.bf16.msra.mxu0 %v1404
    %1631 = vmatprep.subr.bf16.mxu0 0
    %1632 = vmatpush1.bf16.msra.mxu0 %v1401
    %1633 = vmatprep.subr.bf16.mxu0 0
    %1634 = vmatpush2.bf16.msra.mxu0 0
    %1635 = vmatprep.subr.bf16.mxu0 0
    %1636 = vmatpush2.bf16.msra.mxu0 0
    %1637 = vmatprep.subr.bf16.mxu0 0
    %1638 = vmatpush2.bf16.msra.mxu0 0
    %1639 = vmatprep.subr.bf16.mxu0 0
    %1640 = vmatpush2.bf16.msra.mxu0 0
    %1641 = vmatprep.subr.bf16.mxu0 0
    %1642 = vmatpush2.bf16.msra.mxu0 0
    %1643 = vmatprep.subr.bf16.mxu0 0
    %1644 = vmatpush2.bf16.msra.mxu0 0
    %1645 = vmatprep.subr.bf16.mxu0 0
    %1646 = vmatpush2.bf16.msra.mxu0 0
    %1647 = vmatprep.subr.bf16.mxu0 0
    %1648 = vmatpush2.bf16.msra.mxu0 0
    %1649 = vmatprep.mubr.bf16.mxu0 0
    %1650 = vmatmul.mubr.bf16.gmra.mxu0 %v332
    %v1651 = vpop.f32.mrf.mxu0
    %v1652 = vadd.f32 %v1612, %v1651
    %v1653 = vpop.f32.mrf.mxu0
    %v1654 = vpop.f32.mrf.mxu0
    %v1655 = vpop.f32.mrf.mxu0
    %1656 = vdwg.mxu0
    %v1657 = vmax.f32 %v1571, 0.0
    %v1658 = vmax.f32 %v1573, 0.0
    %v1659 = vmax.f32 %v1652, 0.0
    %v1660 = vpack.c.bf16 %v1657, %v1657
    %v1661 = vpack.c.bf16 %v1658, %v1658
    %v1662 = vpack.c.bf16 %v1659, %v1659
    %v1663 = vld [vmem:[#allocation7] sm:$0xf]
    %v1664 = vld [vmem:[#allocation7 + $0x4] sm:$0xf]
    %v1665 = vld [vmem:[#allocation7 + $0x8] sm:$0xf]
    %v1666 = vld [vmem:[#allocation7 + $0xc] sm:$0xf]
    %v1667 = vld [vmem:[#allocation7 + $0x10] sm:$0xf]
    %v1668 = vld [vmem:[#allocation7 + $0x14] sm:$0xf]
    %v1669 = vld [vmem:[#allocation7 + $0x18] sm:$0xf]
    %v1670 = vld [vmem:[#allocation7 + $0x1c] sm:$0xf]
    %v1671 = vld [vmem:[#allocation7 + $0x20] sm:$0xf]
    %v1672 = vld [vmem:[#allocation7 + $0x24] sm:$0xf]
    %v1673 = vld [vmem:[#allocation7 + $0x28] sm:$0xf]
    %v1674 = vld [vmem:[#allocation7 + $0x2c] sm:$0xf]
    %v1675 = vld [vmem:[#allocation7 + $0x30] sm:$0xf]
    %v1676 = vld [vmem:[#allocation7 + $0x34] sm:$0xf]
    %v1677 = vld [vmem:[#allocation7 + $0x38] sm:$0xf]
    %v1678 = vld [vmem:[#allocation7 + $0x3c] sm:$0xf]
    %v1679 = vld [vmem:[#allocation7 + $0x40] sm:$0xf]
    %v1680 = vld [vmem:[#allocation7 + $0x44] sm:$0xf]
    %v1681 = vld [vmem:[#allocation7 + $0x48] sm:$0xf]
    %v1682 = vld [vmem:[#allocation7 + $0x4c] sm:$0xf]
    %v1683 = vld [vmem:[#allocation7 + $0x50] sm:$0xf]
    %v1684 = vld [vmem:[#allocation7 + $0x54] sm:$0xf]
    %v1685 = vld [vmem:[#allocation7 + $0x58] sm:$0xf]
    %v1686 = vld [vmem:[#allocation7 + $0x5c] sm:$0xf]
    %v1687 = vld [vmem:[#allocation7 + $0x60] sm:$0xf]
    %v1688 = vld [vmem:[#allocation7 + $0x64] sm:$0xf]
    %v1689 = vld [vmem:[#allocation7 + $0x68] sm:$0xf]
    %v1690 = vld [vmem:[#allocation7 + $0x6c] sm:$0xf]
    %v1691 = vld [vmem:[#allocation7 + $0x70] sm:$0xf]
    %v1692 = vld [vmem:[#allocation7 + $0x74] sm:$0xf]
    %v1693 = vld [vmem:[#allocation7 + $0x78] sm:$0xf]
    %v1694 = vld [vmem:[#allocation7 + $0x7c] sm:$0xf]
    %v1695 = vld [vmem:[#allocation7 + $0x80] sm:$0xf]
    %v1696 = vld [vmem:[#allocation7 + $0x84] sm:$0xf]
    %v1697 = vld [vmem:[#allocation7 + $0x88] sm:$0xf]
    %v1698 = vld [vmem:[#allocation7 + $0x8c] sm:$0xf]
    %v1699 = vld [vmem:[#allocation7 + $0x90] sm:$0xf]
    %v1700 = vld [vmem:[#allocation7 + $0x94] sm:$0xf]
    %v1701 = vld [vmem:[#allocation7 + $0x98] sm:$0xf]
    %v1702 = vld [vmem:[#allocation7 + $0x9c] sm:$0xf]
    %v1703 = vld [vmem:[#allocation7 + $0xa0] sm:$0xf]
    %v1704 = vld [vmem:[#allocation7 + $0xa4] sm:$0xf]
    %v1705 = vld [vmem:[#allocation7 + $0xa8] sm:$0xf]
    %v1706 = vld [vmem:[#allocation7 + $0xac] sm:$0xf]
    %v1707 = vld [vmem:[#allocation7 + $0xb0] sm:$0xf]
    %v1708 = vld [vmem:[#allocation7 + $0xb4] sm:$0xf]
    %v1709 = vld [vmem:[#allocation7 + $0xb8] sm:$0xf]
    %v1710 = vld [vmem:[#allocation7 + $0xbc] sm:$0xf]
    %v1711 = vld [vmem:[#allocation7 + $0xc0] sm:$0xf]
    %v1712 = vld [vmem:[#allocation7 + $0xc4] sm:$0xf]
    %v1713 = vld [vmem:[#allocation7 + $0xc8] sm:$0xf]
    %v1714 = vld [vmem:[#allocation7 + $0xcc] sm:$0xf]
    %v1715 = vld [vmem:[#allocation7 + $0xd0] sm:$0xf]
    %v1716 = vld [vmem:[#allocation7 + $0xd4] sm:$0xf]
    %v1717 = vld [vmem:[#allocation7 + $0xd8] sm:$0xf]
    %v1718 = vld [vmem:[#allocation7 + $0xdc] sm:$0xf]
    %v1719 = vld [vmem:[#allocation7 + $0xe0] sm:$0xf]
    %v1720 = vld [vmem:[#allocation7 + $0xe4] sm:$0xf]
    %v1721 = vld [vmem:[#allocation7 + $0xe8] sm:$0xf]
    %v1722 = vld [vmem:[#allocation7 + $0xec] sm:$0xf]
    %v1723 = vld [vmem:[#allocation7 + $0xf0] sm:$0xf]
    %v1724 = vld [vmem:[#allocation7 + $0xf4] sm:$0xf]
    %v1725 = vld [vmem:[#allocation7 + $0xf8] sm:$0xf]
    %v1726 = vld [vmem:[#allocation7 + $0xfc] sm:$0xf]
    %v1727 = vld [vmem:[#allocation7 + $0x100] sm:$0xf]
    %v1728 = vld [vmem:[#allocation7 + $0x104] sm:$0xf]
    %v1729 = vld [vmem:[#allocation7 + $0x108] sm:$0xf]
    %v1730 = vld [vmem:[#allocation7 + $0x10c] sm:$0xf]
    %v1731 = vld [vmem:[#allocation7 + $0x110] sm:$0xf]
    %v1732 = vld [vmem:[#allocation7 + $0x114] sm:$0xf]
    %v1733 = vld [vmem:[#allocation7 + $0x118] sm:$0xf]
    %v1734 = vld [vmem:[#allocation7 + $0x11c] sm:$0xf]
    %v1735 = vld [vmem:[#allocation7 + $0x120] sm:$0xf]
    %v1736 = vld [vmem:[#allocation7 + $0x124] sm:$0xf]
    %v1737 = vld [vmem:[#allocation7 + $0x128] sm:$0xf]
    %v1738 = vld [vmem:[#allocation7 + $0x12c] sm:$0xf]
    %v1739 = vld [vmem:[#allocation7 + $0x130] sm:$0xf]
    %v1740 = vld [vmem:[#allocation7 + $0x134] sm:$0xf]
    %v1741 = vld [vmem:[#allocation7 + $0x138] sm:$0xf]
    %v1742 = vld [vmem:[#allocation7 + $0x13c] sm:$0xf]
    %v1743 = vld [vmem:[#allocation7 + $0x140] sm:$0xf]
    %v1744 = vld [vmem:[#allocation7 + $0x144] sm:$0xf]
    %v1745 = vld [vmem:[#allocation7 + $0x148] sm:$0xf]
    %v1746 = vld [vmem:[#allocation7 + $0x14c] sm:$0xf]
    %v1747 = vld [vmem:[#allocation7 + $0x150] sm:$0xf]
    %v1748 = vld [vmem:[#allocation7 + $0x154] sm:$0xf]
    %v1749 = vld [vmem:[#allocation7 + $0x158] sm:$0xf]
    %v1750 = vld [vmem:[#allocation7 + $0x15c] sm:$0xf]
    %v1751 = vld [vmem:[#allocation7 + $0x160] sm:$0xf]
    %v1752 = vld [vmem:[#allocation7 + $0x164] sm:$0xf]
    %v1753 = vld [vmem:[#allocation7 + $0x168] sm:$0xf]
    %v1754 = vld [vmem:[#allocation7 + $0x16c] sm:$0xf]
    %v1755 = vld [vmem:[#allocation7 + $0x170] sm:$0xf]
    %v1756 = vld [vmem:[#allocation7 + $0x174] sm:$0xf]
    %v1757 = vld [vmem:[#allocation7 + $0x178] sm:$0xf]
    %v1758 = vld [vmem:[#allocation7 + $0x17c] sm:$0xf]
    %v1807 = vunpack.c.l.b16 %v1711
    %v1808 = vunpack.c.l.b16 %v1712
    %v1809 = vunpack.c.l.b16 %v1713
    %v1810 = vunpack.c.l.b16 %v1714
    %v1811 = vunpack.c.l.b16 %v1715
    %v1812 = vunpack.c.l.b16 %v1716
    %v1813 = vunpack.c.l.b16 %v1717
    %v1814 = vunpack.c.l.b16 %v1718
    %v1815 = vunpack.c.l.b16 %v1719
    %v1816 = vunpack.c.l.b16 %v1720
    %v1817 = vunpack.c.l.b16 %v1721
    %v1818 = vunpack.c.l.b16 %v1722
    %v1819 = vunpack.c.l.b16 %v1723
    %v1820 = vunpack.c.l.b16 %v1724
    %v1821 = vunpack.c.l.b16 %v1725
    %v1822 = vunpack.c.l.b16 %v1726
    %v1823 = vunpack.c.l.b16 %v1727
    %v1824 = vunpack.c.l.b16 %v1728
    %v1825 = vunpack.c.l.b16 %v1729
    %v1826 = vunpack.c.l.b16 %v1730
    %v1827 = vunpack.c.l.b16 %v1731
    %v1828 = vunpack.c.l.b16 %v1732
    %v1829 = vunpack.c.l.b16 %v1733
    %v1830 = vunpack.c.l.b16 %v1734
    %v1831 = vunpack.c.l.b16 %v1735
    %v1832 = vunpack.c.l.b16 %v1736
    %v1833 = vunpack.c.l.b16 %v1737
    %v1834 = vunpack.c.l.b16 %v1738
    %v1835 = vunpack.c.l.b16 %v1739
    %v1836 = vunpack.c.l.b16 %v1740
    %v1837 = vunpack.c.l.b16 %v1741
    %v1838 = vunpack.c.l.b16 %v1742
    %v1839 = vunpack.c.l.b16 %v1743
    %v1840 = vunpack.c.l.b16 %v1744
    %v1841 = vunpack.c.l.b16 %v1745
    %v1842 = vunpack.c.l.b16 %v1746
    %v1843 = vunpack.c.l.b16 %v1747
    %v1844 = vunpack.c.l.b16 %v1748
    %v1845 = vunpack.c.l.b16 %v1749
    %v1846 = vunpack.c.l.b16 %v1750
    %v1847 = vunpack.c.l.b16 %v1751
    %v1848 = vunpack.c.l.b16 %v1752
    %v1849 = vunpack.c.l.b16 %v1753
    %v1850 = vunpack.c.l.b16 %v1754
    %v1851 = vunpack.c.l.b16 %v1755
    %v1852 = vunpack.c.l.b16 %v1756
    %v1853 = vunpack.c.l.b16 %v1757
    %v1854 = vunpack.c.l.b16 %v1758
    %v1855 = vpack.c.b16 %v1808, %v1807
    %v1856 = vpack.c.b16 %v1810, %v1809
    %v1857 = vpack.c.b16 %v1812, %v1811
    %v1858 = vpack.c.b16 %v1814, %v1813
    %v1859 = vpack.c.b16 %v1816, %v1815
    %v1860 = vpack.c.b16 %v1818, %v1817
    %v1861 = vpack.c.b16 %v1820, %v1819
    %v1862 = vpack.c.b16 %v1822, %v1821
    %v1863 = vpack.c.b16 %v1824, %v1823
    %v1864 = vpack.c.b16 %v1826, %v1825
    %v1865 = vpack.c.b16 %v1828, %v1827
    %v1866 = vpack.c.b16 %v1830, %v1829
    %v1867 = vpack.c.b16 %v1832, %v1831
    %v1868 = vpack.c.b16 %v1834, %v1833
    %v1869 = vpack.c.b16 %v1836, %v1835
    %v1870 = vpack.c.b16 %v1838, %v1837
    %v1871 = vpack.c.b16 %v1840, %v1839
    %v1872 = vpack.c.b16 %v1842, %v1841
    %v1873 = vpack.c.b16 %v1844, %v1843
    %v1874 = vpack.c.b16 %v1846, %v1845
    %v1875 = vpack.c.b16 %v1848, %v1847
    %v1876 = vpack.c.b16 %v1850, %v1849
    %v1877 = vpack.c.b16 %v1852, %v1851
    %v1878 = vpack.c.b16 %v1854, %v1853
    %1903 = vmatprep.subr.bf16.mxu0 0
    %1904 = vmatpush1.bf16.msra.mxu0 %v1862
    %1905 = vmatprep.subr.bf16.mxu0 0
    %1906 = vmatpush1.bf16.msra.mxu0 %v1861
    %1907 = vmatprep.subr.bf16.mxu0 0
    %1908 = vmatpush1.bf16.msra.mxu0 %v1860
    %1909 = vmatprep.subr.bf16.mxu0 0
    %1910 = vmatpush1.bf16.msra.mxu0 %v1859
    %1911 = vmatprep.subr.bf16.mxu0 0
    %1912 = vmatpush1.bf16.msra.mxu0 %v1858
    %1913 = vmatprep.subr.bf16.mxu0 0
    %1914 = vmatpush1.bf16.msra.mxu0 %v1857
    %1915 = vmatprep.subr.bf16.mxu0 0
    %1916 = vmatpush1.bf16.msra.mxu0 %v1856
    %1917 = vmatprep.subr.bf16.mxu0 0
    %1918 = vmatpush1.bf16.msra.mxu0 %v1855
    %1919 = vmatprep.subr.bf16.mxu0 0
    %1920 = vmatpush2.bf16.msra.mxu0 %v1870
    %1921 = vmatprep.subr.bf16.mxu0 0
    %1922 = vmatpush2.bf16.msra.mxu0 %v1869
    %1923 = vmatprep.subr.bf16.mxu0 0
    %1924 = vmatpush2.bf16.msra.mxu0 %v1868
    %1925 = vmatprep.subr.bf16.mxu0 0
    %1926 = vmatpush2.bf16.msra.mxu0 %v1867
    %1927 = vmatprep.subr.bf16.mxu0 0
    %1928 = vmatpush2.bf16.msra.mxu0 %v1866
    %1929 = vmatprep.subr.bf16.mxu0 0
    %1930 = vmatpush2.bf16.msra.mxu0 %v1865
    %1931 = vmatprep.subr.bf16.mxu0 0
    %1932 = vmatpush2.bf16.msra.mxu0 %v1864
    %1933 = vmatprep.subr.bf16.mxu0 0
    %1934 = vmatpush2.bf16.msra.mxu0 %v1863
    %1935 = vmatprep.mubr.bf16.mxu0 %v1661
    %1936 = vmatmul.mubr.bf16.gmra.mxu0 %v1660
    %v1937 = vpop.f32.mrf.mxu0
    %v1938 = vadd.f32 0.0, %v1937
    %v1939 = vpop.f32.mrf.mxu0
    %v1940 = vpop.f32.mrf.mxu0
    %v1941 = vpop.f32.mrf.mxu0
    %1942 = vdwg.mxu0
    %1943 = vmatprep.subr.bf16.mxu0 0
    %1944 = vmatpush1.bf16.msra.mxu0 %v1878
    %1945 = vmatprep.subr.bf16.mxu0 0
    %1946 = vmatpush1.bf16.msra.mxu0 %v1877
    %1947 = vmatprep.subr.bf16.mxu0 0
    %1948 = vmatpush1.bf16.msra.mxu0 %v1876
    %1949 = vmatprep.subr.bf16.mxu0 0
    %1950 = vmatpush1.bf16.msra.mxu0 %v1875
    %1951 = vmatprep.subr.bf16.mxu0 0
    %1952 = vmatpush1.bf16.msra.mxu0 %v1874
    %1953 = vmatprep.subr.bf16.mxu0 0
    %1954 = vmatpush1.bf16.msra.mxu0 %v1873
    %1955 = vmatprep.subr.bf16.mxu0 0
    %1956 = vmatpush1.bf16.msra.mxu0 %v1872
    %1957 = vmatprep.subr.bf16.mxu0 0
    %1958 = vmatpush1.bf16.msra.mxu0 %v1871
    %1959 = vmatprep.subr.bf16.mxu0 0
    %1960 = vmatpush2.bf16.msra.mxu0 0
    %1961 = vmatprep.subr.bf16.mxu0 0
    %1962 = vmatpush2.bf16.msra.mxu0 0
    %1963 = vmatprep.subr.bf16.mxu0 0
    %1964 = vmatpush2.bf16.msra.mxu0 0
    %1965 = vmatprep.subr.bf16.mxu0 0
    %1966 = vmatpush2.bf16.msra.mxu0 0
    %1967 = vmatprep.subr.bf16.mxu0 0
    %1968 = vmatpush2.bf16.msra.mxu0 0
    %1969 = vmatprep.subr.bf16.mxu0 0
    %1970 = vmatpush2.bf16.msra.mxu0 0
    %1971 = vmatprep.subr.bf16.mxu0 0
    %1972 = vmatpush2.bf16.msra.mxu0 0
    %1973 = vmatprep.subr.bf16.mxu0 0
    %1974 = vmatpush2.bf16.msra.mxu0 0
    %1975 = vmatprep.mubr.bf16.mxu0 0
    %1976 = vmatmul.mubr.bf16.gmra.mxu0 %v1662
    %v1977 = vpop.f32.mrf.mxu0
    %v1978 = vadd.f32 %v1938, %v1977
    %v1979 = vpop.f32.mrf.mxu0
    %v1980 = vpop.f32.mrf.mxu0
    %v1981 = vpop.f32.mrf.mxu0
    %1982 = vdwg.mxu0
    %v2031 = vunpack.c.l.b16 %v1663
    %v2032 = vunpack.c.l.b16 %v1664
    %v2033 = vunpack.c.l.b16 %v1665
    %v2034 = vunpack.c.l.b16 %v1666
    %v2035 = vunpack.c.l.b16 %v1667
    %v2036 = vunpack.c.l.b16 %v1668
    %v2037 = vunpack.c.l.b16 %v1669
    %v2038 = vunpack.c.l.b16 %v1670
    %v2039 = vunpack.c.l.b16 %v1671
    %v2040 = vunpack.c.l.b16 %v1672
    %v2041 = vunpack.c.l.b16 %v1673
    %v2042 = vunpack.c.l.b16 %v1674
    %v2043 = vunpack.c.l.b16 %v1675
    %v2044 = vunpack.c.l.b16 %v1676
    %v2045 = vunpack.c.l.b16 %v1677
    %v2046 = vunpack.c.l.b16 %v1678
    %v2047 = vunpack.c.l.b16 %v1679
    %v2048 = vunpack.c.l.b16 %v1680
    %v2049 = vunpack.c.l.b16 %v1681
    %v2050 = vunpack.c.l.b16 %v1682
    %v2051 = vunpack.c.l.b16 %v1683
    %v2052 = vunpack.c.l.b16 %v1684
    %v2053 = vunpack.c.l.b16 %v1685
    %v2054 = vunpack.c.l.b16 %v1686
    %v2055 = vunpack.c.l.b16 %v1687
    %v2056 = vunpack.c.l.b16 %v1688
    %v2057 = vunpack.c.l.b16 %v1689
    %v2058 = vunpack.c.l.b16 %v1690
    %v2059 = vunpack.c.l.b16 %v1691
    %v2060 = vunpack.c.l.b16 %v1692
    %v2061 = vunpack.c.l.b16 %v1693
    %v2062 = vunpack.c.l.b16 %v1694
    %v2063 = vunpack.c.l.b16 %v1695
    %v2064 = vunpack.c.l.b16 %v1696
    %v2065 = vunpack.c.l.b16 %v1697
    %v2066 = vunpack.c.l.b16 %v1698
    %v2067 = vunpack.c.l.b16 %v1699
    %v2068 = vunpack.c.l.b16 %v1700
    %v2069 = vunpack.c.l.b16 %v1701
    %v2070 = vunpack.c.l.b16 %v1702
    %v2071 = vunpack.c.l.b16 %v1703
    %v2072 = vunpack.c.l.b16 %v1704
    %v2073 = vunpack.c.l.b16 %v1705
    %v2074 = vunpack.c.l.b16 %v1706
    %v2075 = vunpack.c.l.b16 %v1707
    %v2076 = vunpack.c.l.b16 %v1708
    %v2077 = vunpack.c.l.b16 %v1709
    %v2078 = vunpack.c.l.b16 %v1710
    %v2079 = vpack.c.b16 %v2032, %v2031
    %v2080 = vpack.c.b16 %v2034, %v2033
    %v2081 = vpack.c.b16 %v2036, %v2035
    %v2082 = vpack.c.b16 %v2038, %v2037
    %v2083 = vpack.c.b16 %v2040, %v2039
    %v2084 = vpack.c.b16 %v2042, %v2041
    %v2085 = vpack.c.b16 %v2044, %v2043
    %v2086 = vpack.c.b16 %v2046, %v2045
    %v2087 = vpack.c.b16 %v2048, %v2047
    %v2088 = vpack.c.b16 %v2050, %v2049
    %v2089 = vpack.c.b16 %v2052, %v2051
    %v2090 = vpack.c.b16 %v2054, %v2053
    %v2091 = vpack.c.b16 %v2056, %v2055
    %v2092 = vpack.c.b16 %v2058, %v2057
    %v2093 = vpack.c.b16 %v2060, %v2059
    %v2094 = vpack.c.b16 %v2062, %v2061
    %v2095 = vpack.c.b16 %v2064, %v2063
    %v2096 = vpack.c.b16 %v2066, %v2065
    %v2097 = vpack.c.b16 %v2068, %v2067
    %v2098 = vpack.c.b16 %v2070, %v2069
    %v2099 = vpack.c.b16 %v2072, %v2071
    %v2100 = vpack.c.b16 %v2074, %v2073
    %v2101 = vpack.c.b16 %v2076, %v2075
    %v2102 = vpack.c.b16 %v2078, %v2077
    %2127 = vmatprep.subr.bf16.mxu0 0
    %2128 = vmatpush1.bf16.msra.mxu0 %v2086
    %2129 = vmatprep.subr.bf16.mxu0 0
    %2130 = vmatpush1.bf16.msra.mxu0 %v2085
    %2131 = vmatprep.subr.bf16.mxu0 0
    %2132 = vmatpush1.bf16.msra.mxu0 %v2084
    %2133 = vmatprep.subr.bf16.mxu0 0
    %2134 = vmatpush1.bf16.msra.mxu0 %v2083
    %2135 = vmatprep.subr.bf16.mxu0 0
    %2136 = vmatpush1.bf16.msra.mxu0 %v2082
    %2137 = vmatprep.subr.bf16.mxu0 0
    %2138 = vmatpush1.bf16.msra.mxu0 %v2081
    %2139 = vmatprep.subr.bf16.mxu0 0
    %2140 = vmatpush1.bf16.msra.mxu0 %v2080
    %2141 = vmatprep.subr.bf16.mxu0 0
    %2142 = vmatpush1.bf16.msra.mxu0 %v2079
    %2143 = vmatprep.subr.bf16.mxu0 0
    %2144 = vmatpush2.bf16.msra.mxu0 %v2094
    %2145 = vmatprep.subr.bf16.mxu0 0
    %2146 = vmatpush2.bf16.msra.mxu0 %v2093
    %2147 = vmatprep.subr.bf16.mxu0 0
    %2148 = vmatpush2.bf16.msra.mxu0 %v2092
    %2149 = vmatprep.subr.bf16.mxu0 0
    %2150 = vmatpush2.bf16.msra.mxu0 %v2091
    %2151 = vmatprep.subr.bf16.mxu0 0
    %2152 = vmatpush2.bf16.msra.mxu0 %v2090
    %2153 = vmatprep.subr.bf16.mxu0 0
    %2154 = vmatpush2.bf16.msra.mxu0 %v2089
    %2155 = vmatprep.subr.bf16.mxu0 0
    %2156 = vmatpush2.bf16.msra.mxu0 %v2088
    %2157 = vmatprep.subr.bf16.mxu0 0
    %2158 = vmatpush2.bf16.msra.mxu0 %v2087
    %2159 = vmatprep.mubr.bf16.mxu0 %v996
    %2160 = vmatmul.mubr.bf16.gmra.mxu0 %v995
    %v2161 = vpop.f32.mrf.mxu0
    %v2162 = vadd.f32 %v1978, %v2161
    %v2163 = vpop.f32.mrf.mxu0
    %v2164 = vpop.f32.mrf.mxu0
    %v2165 = vpop.f32.mrf.mxu0
    %2166 = vdwg.mxu0
    %2167 = vmatprep.subr.bf16.mxu0 0
    %2168 = vmatpush1.bf16.msra.mxu0 %v2102
    %2169 = vmatprep.subr.bf16.mxu0 0
    %2170 = vmatpush1.bf16.msra.mxu0 %v2101
    %2171 = vmatprep.subr.bf16.mxu0 0
    %2172 = vmatpush1.bf16.msra.mxu0 %v2100
    %2173 = vmatprep.subr.bf16.mxu0 0
    %2174 = vmatpush1.bf16.msra.mxu0 %v2099
    %2175 = vmatprep.subr.bf16.mxu0 0
    %2176 = vmatpush1.bf16.msra.mxu0 %v2098
    %2177 = vmatprep.subr.bf16.mxu0 0
    %2178 = vmatpush1.bf16.msra.mxu0 %v2097
    %2179 = vmatprep.subr.bf16.mxu0 0
    %2180 = vmatpush1.bf16.msra.mxu0 %v2096
    %2181 = vmatprep.subr.bf16.mxu0 0
    %2182 = vmatpush1.bf16.msra.mxu0 %v2095
    %2183 = vmatprep.subr.bf16.mxu0 0
    %2184 = vmatpush2.bf16.msra.mxu0 0
    %2185 = vmatprep.subr.bf16.mxu0 0
    %2186 = vmatpush2.bf16.msra.mxu0 0
    %2187 = vmatprep.subr.bf16.mxu0 0
    %2188 = vmatpush2.bf16.msra.mxu0 0
    %2189 = vmatprep.subr.bf16.mxu0 0
    %2190 = vmatpush2.bf16.msra.mxu0 0
    %2191 = vmatprep.subr.bf16.mxu0 0
    %2192 = vmatpush2.bf16.msra.mxu0 0
    %2193 = vmatprep.subr.bf16.mxu0 0
    %2194 = vmatpush2.bf16.msra.mxu0 0
    %2195 = vmatprep.subr.bf16.mxu0 0
    %2196 = vmatpush2.bf16.msra.mxu0 0
    %2197 = vmatprep.subr.bf16.mxu0 0
    %2198 = vmatpush2.bf16.msra.mxu0 0
    %2199 = vmatprep.mubr.bf16.mxu0 0
    %2200 = vmatmul.mubr.bf16.gmra.mxu0 %v997
    %v2201 = vpop.f32.mrf.mxu0
    %v2202 = vadd.f32 %v2162, %v2201
    %v2203 = vpop.f32.mrf.mxu0
    %v2204 = vpop.f32.mrf.mxu0
    %v2205 = vpop.f32.mrf.mxu0
    %2206 = vdwg.mxu0
    %v2207 = vld [vmem:[%s8] sm:$0x1]
    %v2209 = vlaneseq
    %v2210 = vshrl.u32 %v2209, 7
    %v2211 = vsub.s32 0, %v2210
    %v2212 = vrot.slane %v2207, %v2211
    %v2214 = vadd.f32 %v2202, %v2212
    %2215 = vst [vmem:[%s9] sm:$0xff] %v2214
    // Predicated region
    $region54: #{manager_critic_forward.1} parent=1 // pred_check
      _
    $region55: #{manager_critic_forward.1} parent=1 // pred_check_branch
      %2217 = sbr.rel (0) target = $region57
    $region56: #{manager_critic_forward.1} parent=1 // pred_region
      _
    $region57: #{manager_critic_forward.1} parent=1 // pred_fallthru
      _
    // Predicated region
    $region58: #{manager_critic_forward.1} parent=1 // pred_check
      _
    $region59: #{manager_critic_forward.1} parent=1 // pred_check_branch
      %2219 = sbr.rel (0) target = $region61
    $region60: #{manager_critic_forward.1} parent=1 // pred_region
      _
    $region61: #{manager_critic_forward.1} parent=1 // pred_fallthru
      _
    %2220 = vsyncpa [#allocation3], 1
    %2221 = vsyncpa [#allocation5], 1
    %2222 = vsyncpa [#allocation8], 1

</llo_original>
